<compile_context>
chip_gen: v7x
topology: tpu7x:2x2x1
jax: 0.10.0
libtpu: 0.0.40
codegen_flags: <defaults>
</compile_context>

<pallas_src>
import functools

import jax
import jax.numpy as jnp
from jax.experimental import pallas as pl
from jax.experimental.pallas import tpu as pltpu


def _round_up(a: int, b: int) -> int:
    return (a + b - 1) // b * b


def _make_kernel(K: int, n_mid: int, D2: int, D: int, TN: int):
    """K eigen components, n_mid = n_layers-2 middle Linear layers."""
    f32 = jnp.float32
    h_dtype = jnp.bfloat16

    def kernel(xv_ref, wa0_ref, wa1_ref, ba_ref, *rest):
        mid_refs = rest[: 2 * n_mid]
        wf_ref = rest[2 * n_mid]
        bf_ref = rest[2 * n_mid + 1]
        o_ref = rest[2 * n_mid + 2]
        h_ref = rest[2 * n_mid + 3]            # (D2, K*TN) bf16 VMEM scratch

        # NaN cleanup once on the whole (2K, TN) block (torch: pos_enc[isnan]=0).
        x = xv_ref[...].astype(f32)
        x = jnp.where(jnp.isnan(x), 0.0, x)

        # linear_A weights, lane-broadcast once (hoisted out of the k loop).
        wa0 = jnp.broadcast_to(wa0_ref[...].astype(f32), (D2, TN))
        wa1 = jnp.broadcast_to(wa1_ref[...].astype(f32), (D2, TN))
        ba = jnp.broadcast_to(ba_ref[...].astype(f32), (D2, TN))

        # linear_A (in_features=2) + ReLU as a VPU outer-product broadcast; the K
        # eigen-component chunks are packed along lanes of the scratch (offsets are
        # multiples of 128 -> aligned stores).
        # TODO(synk): a stride-0 broadcast load (pl.ds(k, D2, stride=0)) could move
        #             the per-k sublane broadcast onto the otherwise-idle load slot.
        for k in range(K):
            vrow = x[k:k + 1, :]                       # (1, TN)  EigVecs[:, k]
            lrow = x[K + k:K + k + 1, :]               # (1, TN)  EigVals[:, k]
            hk = jnp.maximum(wa0 * vrow + wa1 * lrow + ba, 0.0)      # (D2, TN)
            h_ref[:, k * TN:(k + 1) * TN] = hk.astype(h_dtype)

        # Middle Linear(2d,2d)+ReLU layers: one wide MXU dot over all K chunks,
        # bf16 operands, f32 accumulate.
        for j in range(n_mid):
            wm = mid_refs[2 * j][...]                  # (D2, D2) bf16
            bm = mid_refs[2 * j + 1][...].astype(f32)  # (D2, 1)  f32
            h = jnp.dot(wm, h_ref[...], preferred_element_type=f32)
            h_ref[...] = jnp.maximum(h + bm, 0.0).astype(h_dtype)

        # Final Linear(2d, d) + ReLU, then sum over the K lane-chunks (pure VPU
        # adds, no relayout).
        wf = wf_ref[...]                               # (D, D2) bf16
        bf = jnp.broadcast_to(bf_ref[...].astype(f32), (D, TN))
        g = jnp.dot(wf, h_ref[...], preferred_element_type=f32)      # (D, K*TN)
        acc = jnp.maximum(g[:, 0:TN] + bf, 0.0)
        for k in range(1, K):
            acc = acc + jnp.maximum(g[:, k * TN:(k + 1) * TN] + bf, 0.0)

        o_ref[...] = acc.astype(o_ref.dtype)           # lane-dense (D, TN) store

    return kernel


@functools.partial(jax.jit, static_argnames=("tn_max", "return_transposed"))
def lap_pe_node_encoder(x, eig_vals, eig_vecs, params, *, tn_max=2048,
                        return_transposed=False):
    """eig_vecs: (N, K); eig_vals: (N, K, 1).  Returns (N, dim_pe), or the
    lane-dense (dim_pe, N) layout when return_transposed=True (skips the final
    wrapper relayout for consumers that can accept it)."""
    del x  # `x` is accepted but unused by the reference forward.
    N, K = eig_vecs.shape
    wa, ba = params["wa"], params["ba"]          # (D2, 2), (D2,)
    mids = params["mid"]                         # list of ((D2, D2), (D2,))
    wf, bf = params["wf"], params["bf"]          # (D, D2), (D,)
    D2 = wa.shape[0]
    D = wf.shape[0]
    n_mid = len(mids)
    dtype = eig_vecs.dtype

    # ---- Node tile selection -------------------------------------------------
    # Big tiles amortize the ~0.35us fixed per-grid-step cost; tiles are balanced
    # (the last tile is not mostly padding) and, for large N, the grid keeps >= 2
    # steps so the "parallel" axis can shard across v7x's two TensorCores.
    n_tiles = max(1, pl.cdiv(N, tn_max))
    if n_tiles == 1 and N > 512:
        n_tiles = 2
    TN = max(128, _round_up(pl.cdiv(N, n_tiles), 128))
    n_tiles = pl.cdiv(N, TN)
    N_pad = n_tiles * TN

    # ---- Input relayout: ONE fused concat+transpose+pad pass ------------------
    # Rows [0:K] = EigVecs.T, rows [K:2K] = EigVals[..., 0].T   -> (2K, N_pad)
    xv_nat = jnp.concatenate([eig_vecs, eig_vals[..., 0]], axis=1)      # (N, 2K)
    xv = jnp.pad(xv_nat.T, ((0, 0), (0, N_pad - N)))                    # (2K, N_pad)

    # ---- Weight prep: bf16 MXU operands, f32 biases ----------------------------
    wa0 = wa[:, 0:1].astype(jnp.float32)
    wa1 = wa[:, 1:2].astype(jnp.float32)
    ba2 = ba.reshape(D2, 1).astype(jnp.float32)
    wf2 = wf.astype(jnp.bfloat16)
    bf2 = bf.reshape(D, 1).astype(jnp.float32)

    args = [xv, wa0, wa1, ba2]
    in_specs = [
        pl.BlockSpec((2 * K, TN), lambda i: (0, i)),
        pl.BlockSpec((D2, 1), lambda i: (0, 0)),
        pl.BlockSpec((D2, 1), lambda i: (0, 0)),
        pl.BlockSpec((D2, 1), lambda i: (0, 0)),
    ]
    for wm, bm in mids:
        args.append(wm.astype(jnp.bfloat16))
        args.append(bm.reshape(D2, 1).astype(jnp.float32))
        in_specs.append(pl.BlockSpec((D2, D2), lambda i: (0, 0)))
        in_specs.append(pl.BlockSpec((D2, 1), lambda i: (0, 0)))
    args += [wf2, bf2]
    in_specs += [
        pl.BlockSpec((D, D2), lambda i: (0, 0)),
        pl.BlockSpec((D, 1), lambda i: (0, 0)),
    ]

    itemsize = jnp.dtype(dtype).itemsize
    weight_bytes = (3 * D2 + n_mid * (D2 * D2 + D2) + D * D2 + D) * 4
    cost = pl.CostEstimate(
        flops=2 * N_pad * K * (2 * D2 + n_mid * D2 * D2 + D * D2),
        transcendentals=0,
        bytes_accessed=(2 * K + D) * N_pad * itemsize + weight_bytes,
    )

    out = pl.pallas_call(
        _make_kernel(K, n_mid, D2, D, TN),
        out_shape=jax.ShapeDtypeStruct((D, N_pad), dtype),
        grid=(n_tiles,),
        in_specs=in_specs,
        out_specs=pl.BlockSpec((D, TN), lambda i: (0, i)),
        scratch_shapes=[pltpu.VMEM((D2, K * TN), jnp.bfloat16)],
        compiler_params=pltpu.CompilerParams(
            dimension_semantics=("parallel",),
            vmem_limit_bytes=48 * 1024 * 1024,
        ),
        cost_estimate=cost,
    )(*args)

    if return_transposed:
        return out[:, :N]           # lane-dense (dim_pe, N), no extra relayout
    return out[:, :N].T             # (N, dim_pe), matches the PyTorch layout


def lap_pe_node_encoder_ref(x, eig_vals, eig_vecs, params):
    """Pure-JAX f32 reference mirroring the PyTorch forward (eval path)."""
    del x
    pos_enc = jnp.concatenate([eig_vecs[:, :, None], eig_vals], axis=2)   # (N, K, 2)
    pos_enc = jnp.where(jnp.isnan(pos_enc), 0.0, pos_enc)
    h = jnp.maximum(pos_enc @ params["wa"].T + params["ba"], 0.0)
    for wm, bm in params["mid"]:
        h = jnp.maximum(h @ wm.T + bm, 0.0)
    h = jnp.maximum(h @ params["wf"].T + params["bf"], 0.0)
    # torch recomputes the NaN mask *after* zeroing, so the masked_fill_ is a no-op.
    return jnp.sum(h, axis=1)


if __name__ == "__main__":
    # Small shapes consistent with the module: N nodes, K eigen components,
    # d_model = dim_pe = 32, n_layers = 3 (one middle layer).
    N, K, dim_pe = 80, 8, 32
    D2 = 2 * dim_pe

    key = jax.random.PRNGKey(0)
    ks = jax.random.split(key, 8)

    eig_vecs = jax.random.normal(ks[0], (N, K), jnp.float32)
    eig_vals = jax.random.normal(ks[1], (N, K, 1), jnp.float32) * 0.5
    # Simulate padded eigen-decompositions: trailing frequencies are NaN.
    kcount = 4 + (jnp.arange(N) % (K - 3))                       # valid freqs per node
    nan_mask = jnp.arange(K)[None, :] >= kcount[:, None]         # (N, K)
    eig_vecs = jnp.where(nan_mask, jnp.nan, eig_vecs)
    eig_vals = jnp.where(nan_mask[:, :, None], jnp.nan, eig_vals)

    x = jax.random.normal(ks[2], (N, dim_pe), jnp.float32)       # unused by forward

    params = {
        "wa": jax.random.normal(ks[3], (D2, 2), jnp.float32) * 0.5,
        "ba": jax.random.normal(ks[4], (D2,), jnp.float32) * 0.1,
        "mid": [
            (jax.random.normal(ks[5], (D2, D2), jnp.float32) / jnp.sqrt(D2),
             jnp.full((D2,), 0.05, jnp.float32)),
        ],
        "wf": jax.random.normal(ks[6], (dim_pe, D2), jnp.float32) / jnp.sqrt(D2),
        "bf": jax.random.normal(ks[7], (dim_pe,), jnp.float32) * 0.1,
    }

    out = lap_pe_node_encoder(x, eig_vals, eig_vecs, params)
    jax.block_until_ready(out)

    ref = lap_pe_node_encoder_ref(x, eig_vals, eig_vecs, params)
    assert out.shape == (N, dim_pe)
    max_err = float(jnp.max(jnp.abs(out - ref)))
    # bf16 MXU operands with f32 accumulation -> allow small rounding differences
    # vs. the pure-f32 reference.
    assert jnp.allclose(out, ref, atol=5e-2, rtol=5e-2), max_err

    print("KERNEL_OK")
</pallas_src>

<mosaic_0001>
module attributes {stable_mosaic.version = 11 : i64} {
  func.func @kernel(%arg0: i32, %arg1: memref<16x128xf32, #tpu.memory_space<vmem>>, %arg2: memref<64x1xf32, #tpu.memory_space<vmem>>, %arg3: memref<64x1xf32, #tpu.memory_space<vmem>>, %arg4: memref<64x1xf32, #tpu.memory_space<vmem>>, %arg5: memref<64x64xbf16, #tpu.memory_space<vmem>>, %arg6: memref<64x1xf32, #tpu.memory_space<vmem>>, %arg7: memref<32x64xbf16, #tpu.memory_space<vmem>>, %arg8: memref<32x1xf32, #tpu.memory_space<vmem>>, %arg9: memref<32x128xf32, #tpu.memory_space<vmem>>, %arg10: memref<64x1024xbf16, #tpu.memory_space<vmem>>) attributes {dimension_semantics = [#tpu.dimension_semantics<parallel>], iteration_bounds = array<i64: 1>, scalar_prefetch = 0 : i64, scratch_operands = 1 : i64, tpu.core_type = #tpu.core_type<tc>, window_params = [{transform_indices = @transform_0, window_bounds = array<i64: 16, 128>}, {pipeline_mode = #tpu.pipeline_mode<synchronous>, transform_indices = @transform_1, window_bounds = array<i64: 64, 1>}, {pipeline_mode = #tpu.pipeline_mode<synchronous>, transform_indices = @transform_2, window_bounds = array<i64: 64, 1>}, {pipeline_mode = #tpu.pipeline_mode<synchronous>, transform_indices = @transform_3, window_bounds = array<i64: 64, 1>}, {pipeline_mode = #tpu.pipeline_mode<synchronous>, transform_indices = @transform_4, window_bounds = array<i64: 64, 64>}, {pipeline_mode = #tpu.pipeline_mode<synchronous>, transform_indices = @transform_5, window_bounds = array<i64: 64, 1>}, {pipeline_mode = #tpu.pipeline_mode<synchronous>, transform_indices = @transform_6, window_bounds = array<i64: 32, 64>}, {pipeline_mode = #tpu.pipeline_mode<synchronous>, transform_indices = @transform_7, window_bounds = array<i64: 32, 1>}, {transform_indices = @transform_8, window_bounds = array<i64: 32, 128>}]} {
    %c0 = arith.constant 0 : index
    %c0_0 = arith.constant 0 : index
    %0 = vector.load %arg1[%c0, %c0_0] : memref<16x128xf32, #tpu.memory_space<vmem>>, vector<16x128xf32>
    %1 = arith.cmpf one, %0, %0 : vector<16x128xf32>
    %cst = arith.constant 0.000000e+00 : f32
    %2 = vector.broadcast %cst : f32 to vector<16x128xf32>
    %3 = arith.select %1, %2, %0 : vector<16x128xi1>, vector<16x128xf32>
    %c0_1 = arith.constant 0 : index
    %c0_2 = arith.constant 0 : index
    %4 = vector.load %arg2[%c0_1, %c0_2] : memref<64x1xf32, #tpu.memory_space<vmem>>, vector<64x1xf32>
    %5 = vector.shape_cast %4 : vector<64x1xf32> to vector<64x1xf32>
    %6 = vector.broadcast %5 : vector<64x1xf32> to vector<64x128xf32>
    %c0_3 = arith.constant 0 : index
    %c0_4 = arith.constant 0 : index
    %7 = vector.load %arg3[%c0_3, %c0_4] : memref<64x1xf32, #tpu.memory_space<vmem>>, vector<64x1xf32>
    %8 = vector.shape_cast %7 : vector<64x1xf32> to vector<64x1xf32>
    %9 = vector.broadcast %8 : vector<64x1xf32> to vector<64x128xf32>
    %c0_5 = arith.constant 0 : index
    %c0_6 = arith.constant 0 : index
    %10 = vector.load %arg4[%c0_5, %c0_6] : memref<64x1xf32, #tpu.memory_space<vmem>>, vector<64x1xf32>
    %11 = vector.shape_cast %10 : vector<64x1xf32> to vector<64x1xf32>
    %12 = vector.broadcast %11 : vector<64x1xf32> to vector<64x128xf32>
    %13 = vector.extract_strided_slice %3 {offsets = [0, 0], sizes = [1, 128], strides = [1, 1]} : vector<16x128xf32> to vector<1x128xf32>
    %14 = vector.extract_strided_slice %3 {offsets = [8, 0], sizes = [1, 128], strides = [1, 1]} : vector<16x128xf32> to vector<1x128xf32>
    %15 = vector.broadcast %13 : vector<1x128xf32> to vector<64x128xf32>
    %16 = arith.mulf %6, %15 : vector<64x128xf32>
    %17 = vector.broadcast %14 : vector<1x128xf32> to vector<64x128xf32>
    %18 = arith.mulf %9, %17 : vector<64x128xf32>
    %19 = arith.addf %16, %18 : vector<64x128xf32>
    %20 = arith.addf %19, %12 : vector<64x128xf32>
    %cst_7 = arith.constant 0.000000e+00 : f32
    %21 = vector.broadcast %cst_7 : f32 to vector<64x128xf32>
    %22 = arith.maximumf %20, %21 : vector<64x128xf32>
    %23 = arith.truncf %22 : vector<64x128xf32> to vector<64x128xbf16>
    %c0_8 = arith.constant 0 : index
    %c0_9 = arith.constant 0 : index
    %24 = vector.load %arg10[%c0_8, %c0_9] : memref<64x1024xbf16, #tpu.memory_space<vmem>>, vector<64x128xbf16>
    tpu.vector_store %arg10[%c0_8, %c0_9], %23 {strides = array<i32>} : memref<64x1024xbf16, #tpu.memory_space<vmem>>, vector<64x128xbf16>,
    %25 = vector.extract_strided_slice %3 {offsets = [1, 0], sizes = [1, 128], strides = [1, 1]} : vector<16x128xf32> to vector<1x128xf32>
    %26 = vector.extract_strided_slice %3 {offsets = [9, 0], sizes = [1, 128], strides = [1, 1]} : vector<16x128xf32> to vector<1x128xf32>
    %27 = vector.broadcast %25 : vector<1x128xf32> to vector<64x128xf32>
    %28 = arith.mulf %6, %27 : vector<64x128xf32>
    %29 = vector.broadcast %26 : vector<1x128xf32> to vector<64x128xf32>
    %30 = arith.mulf %9, %29 : vector<64x128xf32>
    %31 = arith.addf %28, %30 : vector<64x128xf32>
    %32 = arith.addf %31, %12 : vector<64x128xf32>
    %cst_10 = arith.constant 0.000000e+00 : f32
    %33 = vector.broadcast %cst_10 : f32 to vector<64x128xf32>
    %34 = arith.maximumf %32, %33 : vector<64x128xf32>
    %35 = arith.truncf %34 : vector<64x128xf32> to vector<64x128xbf16>
    %c0_11 = arith.constant 0 : index
    %c128 = arith.constant 128 : index
    %36 = vector.load %arg10[%c0_11, %c128] : memref<64x1024xbf16, #tpu.memory_space<vmem>>, vector<64x128xbf16>
    tpu.vector_store %arg10[%c0_11, %c128], %35 {strides = array<i32>} : memref<64x1024xbf16, #tpu.memory_space<vmem>>, vector<64x128xbf16>,
    %37 = vector.extract_strided_slice %3 {offsets = [2, 0], sizes = [1, 128], strides = [1, 1]} : vector<16x128xf32> to vector<1x128xf32>
    %38 = vector.extract_strided_slice %3 {offsets = [10, 0], sizes = [1, 128], strides = [1, 1]} : vector<16x128xf32> to vector<1x128xf32>
    %39 = vector.broadcast %37 : vector<1x128xf32> to vector<64x128xf32>
    %40 = arith.mulf %6, %39 : vector<64x128xf32>
    %41 = vector.broadcast %38 : vector<1x128xf32> to vector<64x128xf32>
    %42 = arith.mulf %9, %41 : vector<64x128xf32>
    %43 = arith.addf %40, %42 : vector<64x128xf32>
    %44 = arith.addf %43, %12 : vector<64x128xf32>
    %cst_12 = arith.constant 0.000000e+00 : f32
    %45 = vector.broadcast %cst_12 : f32 to vector<64x128xf32>
    %46 = arith.maximumf %44, %45 : vector<64x128xf32>
    %47 = arith.truncf %46 : vector<64x128xf32> to vector<64x128xbf16>
    %c0_13 = arith.constant 0 : index
    %c256 = arith.constant 256 : index
    %48 = vector.load %arg10[%c0_13, %c256] : memref<64x1024xbf16, #tpu.memory_space<vmem>>, vector<64x128xbf16>
    tpu.vector_store %arg10[%c0_13, %c256], %47 {strides = array<i32>} : memref<64x1024xbf16, #tpu.memory_space<vmem>>, vector<64x128xbf16>,
    %49 = vector.extract_strided_slice %3 {offsets = [3, 0], sizes = [1, 128], strides = [1, 1]} : vector<16x128xf32> to vector<1x128xf32>
    %50 = vector.extract_strided_slice %3 {offsets = [11, 0], sizes = [1, 128], strides = [1, 1]} : vector<16x128xf32> to vector<1x128xf32>
    %51 = vector.broadcast %49 : vector<1x128xf32> to vector<64x128xf32>
    %52 = arith.mulf %6, %51 : vector<64x128xf32>
    %53 = vector.broadcast %50 : vector<1x128xf32> to vector<64x128xf32>
    %54 = arith.mulf %9, %53 : vector<64x128xf32>
    %55 = arith.addf %52, %54 : vector<64x128xf32>
    %56 = arith.addf %55, %12 : vector<64x128xf32>
    %cst_14 = arith.constant 0.000000e+00 : f32
    %57 = vector.broadcast %cst_14 : f32 to vector<64x128xf32>
    %58 = arith.maximumf %56, %57 : vector<64x128xf32>
    %59 = arith.truncf %58 : vector<64x128xf32> to vector<64x128xbf16>
    %c0_15 = arith.constant 0 : index
    %c384 = arith.constant 384 : index
    %60 = vector.load %arg10[%c0_15, %c384] : memref<64x1024xbf16, #tpu.memory_space<vmem>>, vector<64x128xbf16>
    tpu.vector_store %arg10[%c0_15, %c384], %59 {strides = array<i32>} : memref<64x1024xbf16, #tpu.memory_space<vmem>>, vector<64x128xbf16>,
    %61 = vector.extract_strided_slice %3 {offsets = [4, 0], sizes = [1, 128], strides = [1, 1]} : vector<16x128xf32> to vector<1x128xf32>
    %62 = vector.extract_strided_slice %3 {offsets = [12, 0], sizes = [1, 128], strides = [1, 1]} : vector<16x128xf32> to vector<1x128xf32>
    %63 = vector.broadcast %61 : vector<1x128xf32> to vector<64x128xf32>
    %64 = arith.mulf %6, %63 : vector<64x128xf32>
    %65 = vector.broadcast %62 : vector<1x128xf32> to vector<64x128xf32>
    %66 = arith.mulf %9, %65 : vector<64x128xf32>
    %67 = arith.addf %64, %66 : vector<64x128xf32>
    %68 = arith.addf %67, %12 : vector<64x128xf32>
    %cst_16 = arith.constant 0.000000e+00 : f32
    %69 = vector.broadcast %cst_16 : f32 to vector<64x128xf32>
    %70 = arith.maximumf %68, %69 : vector<64x128xf32>
    %71 = arith.truncf %70 : vector<64x128xf32> to vector<64x128xbf16>
    %c0_17 = arith.constant 0 : index
    %c512 = arith.constant 512 : index
    %72 = vector.load %arg10[%c0_17, %c512] : memref<64x1024xbf16, #tpu.memory_space<vmem>>, vector<64x128xbf16>
    tpu.vector_store %arg10[%c0_17, %c512], %71 {strides = array<i32>} : memref<64x1024xbf16, #tpu.memory_space<vmem>>, vector<64x128xbf16>,
    %73 = vector.extract_strided_slice %3 {offsets = [5, 0], sizes = [1, 128], strides = [1, 1]} : vector<16x128xf32> to vector<1x128xf32>
    %74 = vector.extract_strided_slice %3 {offsets = [13, 0], sizes = [1, 128], strides = [1, 1]} : vector<16x128xf32> to vector<1x128xf32>
    %75 = vector.broadcast %73 : vector<1x128xf32> to vector<64x128xf32>
    %76 = arith.mulf %6, %75 : vector<64x128xf32>
    %77 = vector.broadcast %74 : vector<1x128xf32> to vector<64x128xf32>
    %78 = arith.mulf %9, %77 : vector<64x128xf32>
    %79 = arith.addf %76, %78 : vector<64x128xf32>
    %80 = arith.addf %79, %12 : vector<64x128xf32>
    %cst_18 = arith.constant 0.000000e+00 : f32
    %81 = vector.broadcast %cst_18 : f32 to vector<64x128xf32>
    %82 = arith.maximumf %80, %81 : vector<64x128xf32>
    %83 = arith.truncf %82 : vector<64x128xf32> to vector<64x128xbf16>
    %c0_19 = arith.constant 0 : index
    %c640 = arith.constant 640 : index
    %84 = vector.load %arg10[%c0_19, %c640] : memref<64x1024xbf16, #tpu.memory_space<vmem>>, vector<64x128xbf16>
    tpu.vector_store %arg10[%c0_19, %c640], %83 {strides = array<i32>} : memref<64x1024xbf16, #tpu.memory_space<vmem>>, vector<64x128xbf16>,
    %85 = vector.extract_strided_slice %3 {offsets = [6, 0], sizes = [1, 128], strides = [1, 1]} : vector<16x128xf32> to vector<1x128xf32>
    %86 = vector.extract_strided_slice %3 {offsets = [14, 0], sizes = [1, 128], strides = [1, 1]} : vector<16x128xf32> to vector<1x128xf32>
    %87 = vector.broadcast %85 : vector<1x128xf32> to vector<64x128xf32>
    %88 = arith.mulf %6, %87 : vector<64x128xf32>
    %89 = vector.broadcast %86 : vector<1x128xf32> to vector<64x128xf32>
    %90 = arith.mulf %9, %89 : vector<64x128xf32>
    %91 = arith.addf %88, %90 : vector<64x128xf32>
    %92 = arith.addf %91, %12 : vector<64x128xf32>
    %cst_20 = arith.constant 0.000000e+00 : f32
    %93 = vector.broadcast %cst_20 : f32 to vector<64x128xf32>
    %94 = arith.maximumf %92, %93 : vector<64x128xf32>
    %95 = arith.truncf %94 : vector<64x128xf32> to vector<64x128xbf16>
    %c0_21 = arith.constant 0 : index
    %c768 = arith.constant 768 : index
    %96 = vector.load %arg10[%c0_21, %c768] : memref<64x1024xbf16, #tpu.memory_space<vmem>>, vector<64x128xbf16>
    tpu.vector_store %arg10[%c0_21, %c768], %95 {strides = array<i32>} : memref<64x1024xbf16, #tpu.memory_space<vmem>>, vector<64x128xbf16>,
    %97 = vector.extract_strided_slice %3 {offsets = [7, 0], sizes = [1, 128], strides = [1, 1]} : vector<16x128xf32> to vector<1x128xf32>
    %98 = vector.extract_strided_slice %3 {offsets = [15, 0], sizes = [1, 128], strides = [1, 1]} : vector<16x128xf32> to vector<1x128xf32>
    %99 = vector.broadcast %97 : vector<1x128xf32> to vector<64x128xf32>
    %100 = arith.mulf %6, %99 : vector<64x128xf32>
    %101 = vector.broadcast %98 : vector<1x128xf32> to vector<64x128xf32>
    %102 = arith.mulf %9, %101 : vector<64x128xf32>
    %103 = arith.addf %100, %102 : vector<64x128xf32>
    %104 = arith.addf %103, %12 : vector<64x128xf32>
    %cst_22 = arith.constant 0.000000e+00 : f32
    %105 = vector.broadcast %cst_22 : f32 to vector<64x128xf32>
    %106 = arith.maximumf %104, %105 : vector<64x128xf32>
    %107 = arith.truncf %106 : vector<64x128xf32> to vector<64x128xbf16>
    %c0_23 = arith.constant 0 : index
    %c896 = arith.constant 896 : index
    %108 = vector.load %arg10[%c0_23, %c896] : memref<64x1024xbf16, #tpu.memory_space<vmem>>, vector<64x128xbf16>
    tpu.vector_store %arg10[%c0_23, %c896], %107 {strides = array<i32>} : memref<64x1024xbf16, #tpu.memory_space<vmem>>, vector<64x128xbf16>,
    %c0_24 = arith.constant 0 : index
    %c0_25 = arith.constant 0 : index
    %109 = vector.load %arg5[%c0_24, %c0_25] : memref<64x64xbf16, #tpu.memory_space<vmem>>, vector<64x64xbf16>
    %c0_26 = arith.constant 0 : index
    %c0_27 = arith.constant 0 : index
    %110 = vector.load %arg6[%c0_26, %c0_27] : memref<64x1xf32, #tpu.memory_space<vmem>>, vector<64x1xf32>
    %c0_28 = arith.constant 0 : index
    %c0_29 = arith.constant 0 : index
    %111 = vector.load %arg10[%c0_28, %c0_29] : memref<64x1024xbf16, #tpu.memory_space<vmem>>, vector<64x1024xbf16>
    %cst_30 = arith.constant dense<0.000000e+00> : vector<64x1024xf32>
    %112 = tpu.matmul %109, %111, %cst_30 {dimension_numbers = #tpu.dot_dimension_numbers<[1], [0], [0], [1], [0, 0, 1, 1], [], []>} : vector<64x64xbf16>, vector<64x1024xbf16>, vector<64x1024xf32> -> vector<64x1024xf32>
    %113 = vector.broadcast %110 : vector<64x1xf32> to vector<64x1024xf32>
    %114 = arith.addf %112, %113 : vector<64x1024xf32>
    %cst_31 = arith.constant 0.000000e+00 : f32
    %115 = vector.broadcast %cst_31 : f32 to vector<64x1024xf32>
    %116 = arith.maximumf %114, %115 : vector<64x1024xf32>
    %117 = arith.truncf %116 : vector<64x1024xf32> to vector<64x1024xbf16>
    %c0_32 = arith.constant 0 : index
    %c0_33 = arith.constant 0 : index
    %118 = vector.load %arg10[%c0_32, %c0_33] : memref<64x1024xbf16, #tpu.memory_space<vmem>>, vector<64x1024xbf16>
    tpu.vector_store %arg10[%c0_32, %c0_33], %117 {strides = array<i32>} : memref<64x1024xbf16, #tpu.memory_space<vmem>>, vector<64x1024xbf16>,
    %c0_34 = arith.constant 0 : index
    %c0_35 = arith.constant 0 : index
    %119 = vector.load %arg7[%c0_34, %c0_35] : memref<32x64xbf16, #tpu.memory_space<vmem>>, vector<32x64xbf16>
    %c0_36 = arith.constant 0 : index
    %c0_37 = arith.constant 0 : index
    %120 = vector.load %arg8[%c0_36, %c0_37] : memref<32x1xf32, #tpu.memory_space<vmem>>, vector<32x1xf32>
    %121 = vector.shape_cast %120 : vector<32x1xf32> to vector<32x1xf32>
    %122 = vector.broadcast %121 : vector<32x1xf32> to vector<32x128xf32>
    %c0_38 = arith.constant 0 : index
    %c0_39 = arith.constant 0 : index
    %123 = vector.load %arg10[%c0_38, %c0_39] : memref<64x1024xbf16, #tpu.memory_space<vmem>>, vector<64x1024xbf16>
    %cst_40 = arith.constant dense<0.000000e+00> : vector<32x1024xf32>
    %124 = tpu.matmul %119, %123, %cst_40 {dimension_numbers = #tpu.dot_dimension_numbers<[1], [0], [0], [1], [0, 0, 1, 1], [], []>} : vector<32x64xbf16>, vector<64x1024xbf16>, vector<32x1024xf32> -> vector<32x1024xf32>
    %125 = vector.extract_strided_slice %124 {offsets = [0, 0], sizes = [32, 128], strides = [1, 1]} : vector<32x1024xf32> to vector<32x128xf32>
    %126 = arith.addf %125, %122 : vector<32x128xf32>
    %cst_41 = arith.constant 0.000000e+00 : f32
    %127 = vector.broadcast %cst_41 : f32 to vector<32x128xf32>
    %128 = arith.maximumf %126, %127 : vector<32x128xf32>
    %129 = vector.extract_strided_slice %124 {offsets = [0, 128], sizes = [32, 128], strides = [1, 1]} : vector<32x1024xf32> to vector<32x128xf32>
    %130 = arith.addf %129, %122 : vector<32x128xf32>
    %cst_42 = arith.constant 0.000000e+00 : f32
    %131 = vector.broadcast %cst_42 : f32 to vector<32x128xf32>
    %132 = arith.maximumf %130, %131 : vector<32x128xf32>
    %133 = arith.addf %128, %132 : vector<32x128xf32>
    %134 = vector.extract_strided_slice %124 {offsets = [0, 256], sizes = [32, 128], strides = [1, 1]} : vector<32x1024xf32> to vector<32x128xf32>
    %135 = arith.addf %134, %122 : vector<32x128xf32>
    %cst_43 = arith.constant 0.000000e+00 : f32
    %136 = vector.broadcast %cst_43 : f32 to vector<32x128xf32>
    %137 = arith.maximumf %135, %136 : vector<32x128xf32>
    %138 = arith.addf %133, %137 : vector<32x128xf32>
    %139 = vector.extract_strided_slice %124 {offsets = [0, 384], sizes = [32, 128], strides = [1, 1]} : vector<32x1024xf32> to vector<32x128xf32>
    %140 = arith.addf %139, %122 : vector<32x128xf32>
    %cst_44 = arith.constant 0.000000e+00 : f32
    %141 = vector.broadcast %cst_44 : f32 to vector<32x128xf32>
    %142 = arith.maximumf %140, %141 : vector<32x128xf32>
    %143 = arith.addf %138, %142 : vector<32x128xf32>
    %144 = vector.extract_strided_slice %124 {offsets = [0, 512], sizes = [32, 128], strides = [1, 1]} : vector<32x1024xf32> to vector<32x128xf32>
    %145 = arith.addf %144, %122 : vector<32x128xf32>
    %cst_45 = arith.constant 0.000000e+00 : f32
    %146 = vector.broadcast %cst_45 : f32 to vector<32x128xf32>
    %147 = arith.maximumf %145, %146 : vector<32x128xf32>
    %148 = arith.addf %143, %147 : vector<32x128xf32>
    %149 = vector.extract_strided_slice %124 {offsets = [0, 640], sizes = [32, 128], strides = [1, 1]} : vector<32x1024xf32> to vector<32x128xf32>
    %150 = arith.addf %149, %122 : vector<32x128xf32>
    %cst_46 = arith.constant 0.000000e+00 : f32
    %151 = vector.broadcast %cst_46 : f32 to vector<32x128xf32>
    %152 = arith.maximumf %150, %151 : vector<32x128xf32>
    %153 = arith.addf %148, %152 : vector<32x128xf32>
    %154 = vector.extract_strided_slice %124 {offsets = [0, 768], sizes = [32, 128], strides = [1, 1]} : vector<32x1024xf32> to vector<32x128xf32>
    %155 = arith.addf %154, %122 : vector<32x128xf32>
    %cst_47 = arith.constant 0.000000e+00 : f32
    %156 = vector.broadcast %cst_47 : f32 to vector<32x128xf32>
    %157 = arith.maximumf %155, %156 : vector<32x128xf32>
    %158 = arith.addf %153, %157 : vector<32x128xf32>
    %159 = vector.extract_strided_slice %124 {offsets = [0, 896], sizes = [32, 128], strides = [1, 1]} : vector<32x1024xf32> to vector<32x128xf32>
    %160 = arith.addf %159, %122 : vector<32x128xf32>
    %cst_48 = arith.constant 0.000000e+00 : f32
    %161 = vector.broadcast %cst_48 : f32 to vector<32x128xf32>
    %162 = arith.maximumf %160, %161 : vector<32x128xf32>
    %163 = arith.addf %158, %162 : vector<32x128xf32>
    %c0_49 = arith.constant 0 : index
    %c0_50 = arith.constant 0 : index
    %164 = vector.load %arg9[%c0_49, %c0_50] : memref<32x128xf32, #tpu.memory_space<vmem>>, vector<32x128xf32>
    tpu.vector_store %arg9[%c0_49, %c0_50], %163 {strides = array<i32>} : memref<32x128xf32, #tpu.memory_space<vmem>>, vector<32x128xf32>,
    return
  }
  func.func @transform_0(%arg0: i32) -> (i32, i32) {
    %c0_i32 = arith.constant 0 : i32
    %c0_i32_0 = arith.constant 0 : i32
    return %c0_i32, %arg0 : i32, i32
  }
  func.func @transform_1(%arg0: i32) -> (i32, i32) {
    %c0_i32 = arith.constant 0 : i32
    %c0_i32_0 = arith.constant 0 : i32
    %c0_i32_1 = arith.constant 0 : i32
    return %c0_i32, %c0_i32_0 : i32, i32
  }
  func.func @transform_2(%arg0: i32) -> (i32, i32) {
    %c0_i32 = arith.constant 0 : i32
    %c0_i32_0 = arith.constant 0 : i32
    %c0_i32_1 = arith.constant 0 : i32
    return %c0_i32, %c0_i32_0 : i32, i32
  }
  func.func @transform_3(%arg0: i32) -> (i32, i32) {
    %c0_i32 = arith.constant 0 : i32
    %c0_i32_0 = arith.constant 0 : i32
    %c0_i32_1 = arith.constant 0 : i32
    return %c0_i32, %c0_i32_0 : i32, i32
  }
  func.func @transform_4(%arg0: i32) -> (i32, i32) {
    %c0_i32 = arith.constant 0 : i32
    %c0_i32_0 = arith.constant 0 : i32
    %c0_i32_1 = arith.constant 0 : i32
    return %c0_i32, %c0_i32_0 : i32, i32
  }
  func.func @transform_5(%arg0: i32) -> (i32, i32) {
    %c0_i32 = arith.constant 0 : i32
    %c0_i32_0 = arith.constant 0 : i32
    %c0_i32_1 = arith.constant 0 : i32
    return %c0_i32, %c0_i32_0 : i32, i32
  }
  func.func @transform_6(%arg0: i32) -> (i32, i32) {
    %c0_i32 = arith.constant 0 : i32
    %c0_i32_0 = arith.constant 0 : i32
    %c0_i32_1 = arith.constant 0 : i32
    return %c0_i32, %c0_i32_0 : i32, i32
  }
  func.func @transform_7(%arg0: i32) -> (i32, i32) {
    %c0_i32 = arith.constant 0 : i32
    %c0_i32_0 = arith.constant 0 : i32
    %c0_i32_1 = arith.constant 0 : i32
    return %c0_i32, %c0_i32_0 : i32, i32
  }
  func.func @transform_8(%arg0: i32) -> (i32, i32) {
    %c0_i32 = arith.constant 0 : i32
    %c0_i32_0 = arith.constant 0 : i32
    return %c0_i32, %arg0 : i32, i32
  }
}

</mosaic_0001>

<llo_original>
// kernel: lap_pe_node_encoder.1
$region0: #{lap_pe_node_encoder.1}
  #allocation0 [shape = 'u32[]', space=smem, size = 0x4, offset = 0x4, fixed_abs, tag = 'smem constant byte address 0x4 - core index']
  #allocation1 [shape = 'u32[144,128]{1,0:T(1,128)}', space=vmem, size = 0x12000, scoped, tag = 'internal scratch']
  #allocation2 [shape = 'bf16[64,1024]{1,0:T(16,128)(2,1)}', space=vmem, size = 0x20000, scoped, tag = 'scratch operand']
  %s0 = inlined_call_operand.vmem [shape: f32[16,128], index: 0, kind: input, shape index: {}]
  %s1 = inlined_call_operand.vmem [shape: f32[64,1], index: 1, kind: input, shape index: {}]
  %s2 = inlined_call_operand.vmem [shape: f32[64,1], index: 2, kind: input, shape index: {}]
  %s3 = inlined_call_operand.vmem [shape: f32[64,1], index: 3, kind: input, shape index: {}]
  %s4 = inlined_call_operand.vmem [shape: bf16[64,64], index: 4, kind: input, shape index: {}]
  %s5 = inlined_call_operand.vmem [shape: f32[64,1], index: 5, kind: input, shape index: {}]
  %s6 = inlined_call_operand.vmem [shape: bf16[32,64], index: 6, kind: input, shape index: {}]
  %s7 = inlined_call_operand.vmem [shape: f32[32,1], index: 7, kind: input, shape index: {}]
  %s8 = inlined_call_operand.vmem [shape: f32[32,128], index: 8, kind: output, shape index: {}]
  %s9 = sld [smem:[#allocation0]]
  $region42: #{lap_pe_node_encoder.1} parent=0
    _
  %s11 = ssub.s32 1, %s9
  %s12 = scalar_select 0, %s11, %s9
  // Predicated region
  $region2: #{lap_pe_node_encoder.1} parent=0 // pred_check
    _
  $region3: #{lap_pe_node_encoder.1} parent=0 // pred_check_branch
    %14 = sbr.rel (0) target = $region5
  $region4: #{lap_pe_node_encoder.1} parent=0 // pred_region
    _
  $region5: #{lap_pe_node_encoder.1} parent=0 // pred_fallthru
    _
  // Predicated region
  $region6: #{lap_pe_node_encoder.1} parent=0 // pred_check
    _
  $region7: #{lap_pe_node_encoder.1} parent=0 // pred_check_branch
    %16 = sbr.rel (0) target = $region9
  $region8: #{lap_pe_node_encoder.1} parent=0 // pred_region
    _
  $region9: #{lap_pe_node_encoder.1} parent=0 // pred_fallthru
    _
  // Predicated region
  $region10: #{lap_pe_node_encoder.1} parent=0 // pred_check
    _
  $region11: #{lap_pe_node_encoder.1} parent=0 // pred_check_branch
    %18 = sbr.rel (0) target = $region13
  $region12: #{lap_pe_node_encoder.1} parent=0 // pred_region
    _
  $region13: #{lap_pe_node_encoder.1} parent=0 // pred_fallthru
    _
  // Predicated region
  $region14: #{lap_pe_node_encoder.1} parent=0 // pred_check
    _
  $region15: #{lap_pe_node_encoder.1} parent=0 // pred_check_branch
    %20 = sbr.rel (0) target = $region17
  $region16: #{lap_pe_node_encoder.1} parent=0 // pred_region
    _
  $region17: #{lap_pe_node_encoder.1} parent=0 // pred_fallthru
    _
  // Predicated region
  $region18: #{lap_pe_node_encoder.1} parent=0 // pred_check
    _
  $region19: #{lap_pe_node_encoder.1} parent=0 // pred_check_branch
    %22 = sbr.rel (0) target = $region21
  $region20: #{lap_pe_node_encoder.1} parent=0 // pred_region
    _
  $region21: #{lap_pe_node_encoder.1} parent=0 // pred_fallthru
    _
  // Predicated region
  $region22: #{lap_pe_node_encoder.1} parent=0 // pred_check
    _
  $region23: #{lap_pe_node_encoder.1} parent=0 // pred_check_branch
    %24 = sbr.rel (0) target = $region25
  $region24: #{lap_pe_node_encoder.1} parent=0 // pred_region
    _
  $region25: #{lap_pe_node_encoder.1} parent=0 // pred_fallthru
    _
  // Predicated region
  $region26: #{lap_pe_node_encoder.1} parent=0 // pred_check
    _
  $region27: #{lap_pe_node_encoder.1} parent=0 // pred_check_branch
    %26 = sbr.rel (0) target = $region29
  $region28: #{lap_pe_node_encoder.1} parent=0 // pred_region
    _
  $region29: #{lap_pe_node_encoder.1} parent=0 // pred_fallthru
    _
  // Predicated region
  $region30: #{lap_pe_node_encoder.1} parent=0 // pred_check
    _
  $region31: #{lap_pe_node_encoder.1} parent=0 // pred_check_branch
    %28 = sbr.rel (0) target = $region33
  $region32: #{lap_pe_node_encoder.1} parent=0 // pred_region
    _
  $region33: #{lap_pe_node_encoder.1} parent=0 // pred_fallthru
    _
  %v30 = vld [vmem:[%s0] sm:$0xff]
  %v31 = vld [vmem:[%s0 + $0x8] sm:$0xff]
  %vm32 = vcmp.ne.f32.partialorder %v30, %v30
  %vm33 = vcmp.ne.f32.partialorder %v31, %v31
  %v34 = vsel %vm32, 0.0, %v30
  %v35 = vsel %vm33, 0.0, %v31
  %v36 = vld [vmem:[%s1] sm:$0xff]
  %v37 = vld [vmem:[%s1 + $0x8] sm:$0xff]
  %v38 = vld [vmem:[%s1 + $0x10] sm:$0xff]
  %v39 = vld [vmem:[%s1 + $0x18] sm:$0xff]
  %v40 = vld [vmem:[%s1 + $0x20] sm:$0xff]
  %v41 = vld [vmem:[%s1 + $0x28] sm:$0xff]
  %v42 = vld [vmem:[%s1 + $0x30] sm:$0xff]
  %v43 = vld [vmem:[%s1 + $0x38] sm:$0xff]
  %45 = vset.pattern.permute.xlu0 0
  %46 = vperm.xlu0 %45, %v36
  %v47 = vpop.permute.xlu0 %46
  %50 = vset.pattern.permute.xlu0 0
  %51 = vperm.xlu0 %50, %v37
  %v52 = vpop.permute.xlu0 %51
  %55 = vset.pattern.permute.xlu0 0
  %56 = vperm.xlu0 %55, %v38
  %v57 = vpop.permute.xlu0 %56
  %60 = vset.pattern.permute.xlu0 0
  %61 = vperm.xlu0 %60, %v39
  %v62 = vpop.permute.xlu0 %61
  %65 = vset.pattern.permute.xlu0 0
  %66 = vperm.xlu0 %65, %v40
  %v67 = vpop.permute.xlu0 %66
  %70 = vset.pattern.permute.xlu0 0
  %71 = vperm.xlu0 %70, %v41
  %v72 = vpop.permute.xlu0 %71
  %75 = vset.pattern.permute.xlu0 0
  %76 = vperm.xlu0 %75, %v42
  %v77 = vpop.permute.xlu0 %76
  %80 = vset.pattern.permute.xlu0 0
  %81 = vperm.xlu0 %80, %v43
  %v82 = vpop.permute.xlu0 %81
  %v84 = vld [vmem:[%s2] sm:$0xff]
  %v85 = vld [vmem:[%s2 + $0x8] sm:$0xff]
  %v86 = vld [vmem:[%s2 + $0x10] sm:$0xff]
  %v87 = vld [vmem:[%s2 + $0x18] sm:$0xff]
  %v88 = vld [vmem:[%s2 + $0x20] sm:$0xff]
  %v89 = vld [vmem:[%s2 + $0x28] sm:$0xff]
  %v90 = vld [vmem:[%s2 + $0x30] sm:$0xff]
  %v91 = vld [vmem:[%s2 + $0x38] sm:$0xff]
  %93 = vset.pattern.permute.xlu0 0
  %94 = vperm.xlu0 %93, %v84
  %v95 = vpop.permute.xlu0 %94
  %98 = vset.pattern.permute.xlu0 0
  %99 = vperm.xlu0 %98, %v85
  %v100 = vpop.permute.xlu0 %99
  %103 = vset.pattern.permute.xlu0 0
  %104 = vperm.xlu0 %103, %v86
  %v105 = vpop.permute.xlu0 %104
  %108 = vset.pattern.permute.xlu0 0
  %109 = vperm.xlu0 %108, %v87
  %v110 = vpop.permute.xlu0 %109
  %113 = vset.pattern.permute.xlu0 0
  %114 = vperm.xlu0 %113, %v88
  %v115 = vpop.permute.xlu0 %114
  %118 = vset.pattern.permute.xlu0 0
  %119 = vperm.xlu0 %118, %v89
  %v120 = vpop.permute.xlu0 %119
  %123 = vset.pattern.permute.xlu0 0
  %124 = vperm.xlu0 %123, %v90
  %v125 = vpop.permute.xlu0 %124
  %128 = vset.pattern.permute.xlu0 0
  %129 = vperm.xlu0 %128, %v91
  %v130 = vpop.permute.xlu0 %129
  %v132 = vld [vmem:[%s3] sm:$0xff]
  %v133 = vld [vmem:[%s3 + $0x8] sm:$0xff]
  %v134 = vld [vmem:[%s3 + $0x10] sm:$0xff]
  %v135 = vld [vmem:[%s3 + $0x18] sm:$0xff]
  %v136 = vld [vmem:[%s3 + $0x20] sm:$0xff]
  %v137 = vld [vmem:[%s3 + $0x28] sm:$0xff]
  %v138 = vld [vmem:[%s3 + $0x30] sm:$0xff]
  %v139 = vld [vmem:[%s3 + $0x38] sm:$0xff]
  %141 = vset.pattern.permute.xlu0 0
  %142 = vperm.xlu0 %141, %v132
  %v143 = vpop.permute.xlu0 %142
  %146 = vset.pattern.permute.xlu0 0
  %147 = vperm.xlu0 %146, %v133
  %v148 = vpop.permute.xlu0 %147
  %151 = vset.pattern.permute.xlu0 0
  %152 = vperm.xlu0 %151, %v134
  %v153 = vpop.permute.xlu0 %152
  %156 = vset.pattern.permute.xlu0 0
  %157 = vperm.xlu0 %156, %v135
  %v158 = vpop.permute.xlu0 %157
  %161 = vset.pattern.permute.xlu0 0
  %162 = vperm.xlu0 %161, %v136
  %v163 = vpop.permute.xlu0 %162
  %166 = vset.pattern.permute.xlu0 0
  %167 = vperm.xlu0 %166, %v137
  %v168 = vpop.permute.xlu0 %167
  %171 = vset.pattern.permute.xlu0 0
  %172 = vperm.xlu0 %171, %v138
  %v173 = vpop.permute.xlu0 %172
  %176 = vset.pattern.permute.xlu0 0
  %177 = vperm.xlu0 %176, %v139
  %v178 = vpop.permute.xlu0 %177
  %v180 = vlaneseq
  %v181 = vshrl.u32 %v180, 7
  %v182 = vsub.s32 0, %v181
  %v183 = vrot.slane %v34, %v182
  %v184 = vmul.f32 %v47, %v183
  %v185 = vmul.f32 %v52, %v183
  %v186 = vmul.f32 %v57, %v183
  %v187 = vmul.f32 %v62, %v183
  %v188 = vmul.f32 %v67, %v183
  %v189 = vmul.f32 %v72, %v183
  %v190 = vmul.f32 %v77, %v183
  %v191 = vmul.f32 %v82, %v183
  %v192 = vlaneseq
  %v193 = vshrl.u32 %v192, 7
  %v194 = vsub.s32 0, %v193
  %v195 = vrot.slane %v35, %v194
  %v196 = vmul.f32 %v95, %v195
  %v197 = vmul.f32 %v100, %v195
  %v198 = vmul.f32 %v105, %v195
  %v199 = vmul.f32 %v110, %v195
  %v200 = vmul.f32 %v115, %v195
  %v201 = vmul.f32 %v120, %v195
  %v202 = vmul.f32 %v125, %v195
  %v203 = vmul.f32 %v130, %v195
  %v204 = vadd.f32 %v184, %v196
  %v205 = vadd.f32 %v185, %v197
  %v206 = vadd.f32 %v186, %v198
  %v207 = vadd.f32 %v187, %v199
  %v208 = vadd.f32 %v188, %v200
  %v209 = vadd.f32 %v189, %v201
  %v210 = vadd.f32 %v190, %v202
  %v211 = vadd.f32 %v191, %v203
  %v212 = vadd.f32 %v204, %v143
  %v213 = vadd.f32 %v205, %v148
  %v214 = vadd.f32 %v206, %v153
  %v215 = vadd.f32 %v207, %v158
  %v216 = vadd.f32 %v208, %v163
  %v217 = vadd.f32 %v209, %v168
  %v218 = vadd.f32 %v210, %v173
  %v219 = vadd.f32 %v211, %v178
  %v220 = vmax.f32 %v212, 0.0
  %v221 = vmax.f32 %v213, 0.0
  %v222 = vmax.f32 %v214, 0.0
  %v223 = vmax.f32 %v215, 0.0
  %v224 = vmax.f32 %v216, 0.0
  %v225 = vmax.f32 %v217, 0.0
  %v226 = vmax.f32 %v218, 0.0
  %v227 = vmax.f32 %v219, 0.0
  %v228 = vpack.c.bf16 %v221, %v220
  %v229 = vpack.c.bf16 %v223, %v222
  %v230 = vpack.c.bf16 %v225, %v224
  %v231 = vpack.c.bf16 %v227, %v226
  %232 = vst [vmem:[#allocation2] sm:$0xff] %v228
  %233 = vst [vmem:[#allocation2 + $0x40] sm:$0xff] %v229
  %234 = vst [vmem:[#allocation2 + $0x80] sm:$0xff] %v230
  %235 = vst [vmem:[#allocation2 + $0xc0] sm:$0xff] %v231
  %v236 = vlaneseq
  %v237 = vshrl.u32 %v236, 7
  %v238 = vsub.s32 1, %v237
  %v239 = vrot.slane %v34, %v238
  %v240 = vmul.f32 %v47, %v239
  %v241 = vmul.f32 %v52, %v239
  %v242 = vmul.f32 %v57, %v239
  %v243 = vmul.f32 %v62, %v239
  %v244 = vmul.f32 %v67, %v239
  %v245 = vmul.f32 %v72, %v239
  %v246 = vmul.f32 %v77, %v239
  %v247 = vmul.f32 %v82, %v239
  %v248 = vlaneseq
  %v249 = vshrl.u32 %v248, 7
  %v250 = vsub.s32 1, %v249
  %v251 = vrot.slane %v35, %v250
  %v252 = vmul.f32 %v95, %v251
  %v253 = vmul.f32 %v100, %v251
  %v254 = vmul.f32 %v105, %v251
  %v255 = vmul.f32 %v110, %v251
  %v256 = vmul.f32 %v115, %v251
  %v257 = vmul.f32 %v120, %v251
  %v258 = vmul.f32 %v125, %v251
  %v259 = vmul.f32 %v130, %v251
  %v260 = vadd.f32 %v240, %v252
  %v261 = vadd.f32 %v241, %v253
  %v262 = vadd.f32 %v242, %v254
  %v263 = vadd.f32 %v243, %v255
  %v264 = vadd.f32 %v244, %v256
  %v265 = vadd.f32 %v245, %v257
  %v266 = vadd.f32 %v246, %v258
  %v267 = vadd.f32 %v247, %v259
  %v268 = vadd.f32 %v260, %v143
  %v269 = vadd.f32 %v261, %v148
  %v270 = vadd.f32 %v262, %v153
  %v271 = vadd.f32 %v263, %v158
  %v272 = vadd.f32 %v264, %v163
  %v273 = vadd.f32 %v265, %v168
  %v274 = vadd.f32 %v266, %v173
  %v275 = vadd.f32 %v267, %v178
  %v276 = vmax.f32 %v268, 0.0
  %v277 = vmax.f32 %v269, 0.0
  %v278 = vmax.f32 %v270, 0.0
  %v279 = vmax.f32 %v271, 0.0
  %v280 = vmax.f32 %v272, 0.0
  %v281 = vmax.f32 %v273, 0.0
  %v282 = vmax.f32 %v274, 0.0
  %v283 = vmax.f32 %v275, 0.0
  %v284 = vpack.c.bf16 %v277, %v276
  %v285 = vpack.c.bf16 %v279, %v278
  %v286 = vpack.c.bf16 %v281, %v280
  %v287 = vpack.c.bf16 %v283, %v282
  %288 = vst [vmem:[#allocation2 + $0x8] sm:$0xff] %v284
  %289 = vst [vmem:[#allocation2 + $0x48] sm:$0xff] %v285
  %290 = vst [vmem:[#allocation2 + $0x88] sm:$0xff] %v286
  %291 = vst [vmem:[#allocation2 + $0xc8] sm:$0xff] %v287
  %v292 = vlaneseq
  %v293 = vshrl.u32 %v292, 7
  %v294 = vsub.s32 2, %v293
  %v295 = vrot.slane %v34, %v294
  %v296 = vmul.f32 %v47, %v295
  %v297 = vmul.f32 %v52, %v295
  %v298 = vmul.f32 %v57, %v295
  %v299 = vmul.f32 %v62, %v295
  %v300 = vmul.f32 %v67, %v295
  %v301 = vmul.f32 %v72, %v295
  %v302 = vmul.f32 %v77, %v295
  %v303 = vmul.f32 %v82, %v295
  %v304 = vlaneseq
  %v305 = vshrl.u32 %v304, 7
  %v306 = vsub.s32 2, %v305
  %v307 = vrot.slane %v35, %v306
  %v308 = vmul.f32 %v95, %v307
  %v309 = vmul.f32 %v100, %v307
  %v310 = vmul.f32 %v105, %v307
  %v311 = vmul.f32 %v110, %v307
  %v312 = vmul.f32 %v115, %v307
  %v313 = vmul.f32 %v120, %v307
  %v314 = vmul.f32 %v125, %v307
  %v315 = vmul.f32 %v130, %v307
  %v316 = vadd.f32 %v296, %v308
  %v317 = vadd.f32 %v297, %v309
  %v318 = vadd.f32 %v298, %v310
  %v319 = vadd.f32 %v299, %v311
  %v320 = vadd.f32 %v300, %v312
  %v321 = vadd.f32 %v301, %v313
  %v322 = vadd.f32 %v302, %v314
  %v323 = vadd.f32 %v303, %v315
  %v324 = vadd.f32 %v316, %v143
  %v325 = vadd.f32 %v317, %v148
  %v326 = vadd.f32 %v318, %v153
  %v327 = vadd.f32 %v319, %v158
  %v328 = vadd.f32 %v320, %v163
  %v329 = vadd.f32 %v321, %v168
  %v330 = vadd.f32 %v322, %v173
  %v331 = vadd.f32 %v323, %v178
  %v332 = vmax.f32 %v324, 0.0
  %v333 = vmax.f32 %v325, 0.0
  %v334 = vmax.f32 %v326, 0.0
  %v335 = vmax.f32 %v327, 0.0
  %v336 = vmax.f32 %v328, 0.0
  %v337 = vmax.f32 %v329, 0.0
  %v338 = vmax.f32 %v330, 0.0
  %v339 = vmax.f32 %v331, 0.0
  %v340 = vpack.c.bf16 %v333, %v332
  %v341 = vpack.c.bf16 %v335, %v334
  %v342 = vpack.c.bf16 %v337, %v336
  %v343 = vpack.c.bf16 %v339, %v338
  %344 = vst [vmem:[#allocation2 + $0x10] sm:$0xff] %v340
  %345 = vst [vmem:[#allocation2 + $0x50] sm:$0xff] %v341
  %346 = vst [vmem:[#allocation2 + $0x90] sm:$0xff] %v342
  %347 = vst [vmem:[#allocation2 + $0xd0] sm:$0xff] %v343
  %v348 = vlaneseq
  %v349 = vshrl.u32 %v348, 7
  %v350 = vsub.s32 3, %v349
  %v351 = vrot.slane %v34, %v350
  %v352 = vmul.f32 %v47, %v351
  %v353 = vmul.f32 %v52, %v351
  %v354 = vmul.f32 %v57, %v351
  %v355 = vmul.f32 %v62, %v351
  %v356 = vmul.f32 %v67, %v351
  %v357 = vmul.f32 %v72, %v351
  %v358 = vmul.f32 %v77, %v351
  %v359 = vmul.f32 %v82, %v351
  %v360 = vlaneseq
  %v361 = vshrl.u32 %v360, 7
  %v362 = vsub.s32 3, %v361
  %v363 = vrot.slane %v35, %v362
  %v364 = vmul.f32 %v95, %v363
  %v365 = vmul.f32 %v100, %v363
  %v366 = vmul.f32 %v105, %v363
  %v367 = vmul.f32 %v110, %v363
  %v368 = vmul.f32 %v115, %v363
  %v369 = vmul.f32 %v120, %v363
  %v370 = vmul.f32 %v125, %v363
  %v371 = vmul.f32 %v130, %v363
  %v372 = vadd.f32 %v352, %v364
  %v373 = vadd.f32 %v353, %v365
  %v374 = vadd.f32 %v354, %v366
  %v375 = vadd.f32 %v355, %v367
  %v376 = vadd.f32 %v356, %v368
  %v377 = vadd.f32 %v357, %v369
  %v378 = vadd.f32 %v358, %v370
  %v379 = vadd.f32 %v359, %v371
  %v380 = vadd.f32 %v372, %v143
  %v381 = vadd.f32 %v373, %v148
  %v382 = vadd.f32 %v374, %v153
  %v383 = vadd.f32 %v375, %v158
  %v384 = vadd.f32 %v376, %v163
  %v385 = vadd.f32 %v377, %v168
  %v386 = vadd.f32 %v378, %v173
  %v387 = vadd.f32 %v379, %v178
  %v388 = vmax.f32 %v380, 0.0
  %v389 = vmax.f32 %v381, 0.0
  %v390 = vmax.f32 %v382, 0.0
  %v391 = vmax.f32 %v383, 0.0
  %v392 = vmax.f32 %v384, 0.0
  %v393 = vmax.f32 %v385, 0.0
  %v394 = vmax.f32 %v386, 0.0
  %v395 = vmax.f32 %v387, 0.0
  %v396 = vpack.c.bf16 %v389, %v388
  %v397 = vpack.c.bf16 %v391, %v390
  %v398 = vpack.c.bf16 %v393, %v392
  %v399 = vpack.c.bf16 %v395, %v394
  %400 = vst [vmem:[#allocation2 + $0x18] sm:$0xff] %v396
  %401 = vst [vmem:[#allocation2 + $0x58] sm:$0xff] %v397
  %402 = vst [vmem:[#allocation2 + $0x98] sm:$0xff] %v398
  %403 = vst [vmem:[#allocation2 + $0xd8] sm:$0xff] %v399
  %v404 = vlaneseq
  %v405 = vshrl.u32 %v404, 7
  %v406 = vsub.s32 4, %v405
  %v407 = vrot.slane %v34, %v406
  %v408 = vmul.f32 %v47, %v407
  %v409 = vmul.f32 %v52, %v407
  %v410 = vmul.f32 %v57, %v407
  %v411 = vmul.f32 %v62, %v407
  %v412 = vmul.f32 %v67, %v407
  %v413 = vmul.f32 %v72, %v407
  %v414 = vmul.f32 %v77, %v407
  %v415 = vmul.f32 %v82, %v407
  %v416 = vlaneseq
  %v417 = vshrl.u32 %v416, 7
  %v418 = vsub.s32 4, %v417
  %v419 = vrot.slane %v35, %v418
  %v420 = vmul.f32 %v95, %v419
  %v421 = vmul.f32 %v100, %v419
  %v422 = vmul.f32 %v105, %v419
  %v423 = vmul.f32 %v110, %v419
  %v424 = vmul.f32 %v115, %v419
  %v425 = vmul.f32 %v120, %v419
  %v426 = vmul.f32 %v125, %v419
  %v427 = vmul.f32 %v130, %v419
  %v428 = vadd.f32 %v408, %v420
  %v429 = vadd.f32 %v409, %v421
  %v430 = vadd.f32 %v410, %v422
  %v431 = vadd.f32 %v411, %v423
  %v432 = vadd.f32 %v412, %v424
  %v433 = vadd.f32 %v413, %v425
  %v434 = vadd.f32 %v414, %v426
  %v435 = vadd.f32 %v415, %v427
  %v436 = vadd.f32 %v428, %v143
  %v437 = vadd.f32 %v429, %v148
  %v438 = vadd.f32 %v430, %v153
  %v439 = vadd.f32 %v431, %v158
  %v440 = vadd.f32 %v432, %v163
  %v441 = vadd.f32 %v433, %v168
  %v442 = vadd.f32 %v434, %v173
  %v443 = vadd.f32 %v435, %v178
  %v444 = vmax.f32 %v436, 0.0
  %v445 = vmax.f32 %v437, 0.0
  %v446 = vmax.f32 %v438, 0.0
  %v447 = vmax.f32 %v439, 0.0
  %v448 = vmax.f32 %v440, 0.0
  %v449 = vmax.f32 %v441, 0.0
  %v450 = vmax.f32 %v442, 0.0
  %v451 = vmax.f32 %v443, 0.0
  %v452 = vpack.c.bf16 %v445, %v444
  %v453 = vpack.c.bf16 %v447, %v446
  %v454 = vpack.c.bf16 %v449, %v448
  %v455 = vpack.c.bf16 %v451, %v450
  %456 = vst [vmem:[#allocation2 + $0x20] sm:$0xff] %v452
  %457 = vst [vmem:[#allocation2 + $0x60] sm:$0xff] %v453
  %458 = vst [vmem:[#allocation2 + $0xa0] sm:$0xff] %v454
  %459 = vst [vmem:[#allocation2 + $0xe0] sm:$0xff] %v455
  %v460 = vlaneseq
  %v461 = vshrl.u32 %v460, 7
  %v462 = vsub.s32 5, %v461
  %v463 = vrot.slane %v34, %v462
  %v464 = vmul.f32 %v47, %v463
  %v465 = vmul.f32 %v52, %v463
  %v466 = vmul.f32 %v57, %v463
  %v467 = vmul.f32 %v62, %v463
  %v468 = vmul.f32 %v67, %v463
  %v469 = vmul.f32 %v72, %v463
  %v470 = vmul.f32 %v77, %v463
  %v471 = vmul.f32 %v82, %v463
  %v472 = vlaneseq
  %v473 = vshrl.u32 %v472, 7
  %v474 = vsub.s32 5, %v473
  %v475 = vrot.slane %v35, %v474
  %v476 = vmul.f32 %v95, %v475
  %v477 = vmul.f32 %v100, %v475
  %v478 = vmul.f32 %v105, %v475
  %v479 = vmul.f32 %v110, %v475
  %v480 = vmul.f32 %v115, %v475
  %v481 = vmul.f32 %v120, %v475
  %v482 = vmul.f32 %v125, %v475
  %v483 = vmul.f32 %v130, %v475
  %v484 = vadd.f32 %v464, %v476
  %v485 = vadd.f32 %v465, %v477
  %v486 = vadd.f32 %v466, %v478
  %v487 = vadd.f32 %v467, %v479
  %v488 = vadd.f32 %v468, %v480
  %v489 = vadd.f32 %v469, %v481
  %v490 = vadd.f32 %v470, %v482
  %v491 = vadd.f32 %v471, %v483
  %v492 = vadd.f32 %v484, %v143
  %v493 = vadd.f32 %v485, %v148
  %v494 = vadd.f32 %v486, %v153
  %v495 = vadd.f32 %v487, %v158
  %v496 = vadd.f32 %v488, %v163
  %v497 = vadd.f32 %v489, %v168
  %v498 = vadd.f32 %v490, %v173
  %v499 = vadd.f32 %v491, %v178
  %v500 = vmax.f32 %v492, 0.0
  %v501 = vmax.f32 %v493, 0.0
  %v502 = vmax.f32 %v494, 0.0
  %v503 = vmax.f32 %v495, 0.0
  %v504 = vmax.f32 %v496, 0.0
  %v505 = vmax.f32 %v497, 0.0
  %v506 = vmax.f32 %v498, 0.0
  %v507 = vmax.f32 %v499, 0.0
  %v508 = vpack.c.bf16 %v501, %v500
  %v509 = vpack.c.bf16 %v503, %v502
  %v510 = vpack.c.bf16 %v505, %v504
  %v511 = vpack.c.bf16 %v507, %v506
  %512 = vst [vmem:[#allocation2 + $0x28] sm:$0xff] %v508
  %513 = vst [vmem:[#allocation2 + $0x68] sm:$0xff] %v509
  %514 = vst [vmem:[#allocation2 + $0xa8] sm:$0xff] %v510
  %515 = vst [vmem:[#allocation2 + $0xe8] sm:$0xff] %v511
  %v516 = vlaneseq
  %v517 = vshrl.u32 %v516, 7
  %v518 = vsub.s32 6, %v517
  %v519 = vrot.slane %v34, %v518
  %v520 = vmul.f32 %v47, %v519
  %v521 = vmul.f32 %v52, %v519
  %v522 = vmul.f32 %v57, %v519
  %v523 = vmul.f32 %v62, %v519
  %v524 = vmul.f32 %v67, %v519
  %v525 = vmul.f32 %v72, %v519
  %v526 = vmul.f32 %v77, %v519
  %v527 = vmul.f32 %v82, %v519
  %v528 = vlaneseq
  %v529 = vshrl.u32 %v528, 7
  %v530 = vsub.s32 6, %v529
  %v531 = vrot.slane %v35, %v530
  %v532 = vmul.f32 %v95, %v531
  %v533 = vmul.f32 %v100, %v531
  %v534 = vmul.f32 %v105, %v531
  %v535 = vmul.f32 %v110, %v531
  %v536 = vmul.f32 %v115, %v531
  %v537 = vmul.f32 %v120, %v531
  %v538 = vmul.f32 %v125, %v531
  %v539 = vmul.f32 %v130, %v531
  %v540 = vadd.f32 %v520, %v532
  %v541 = vadd.f32 %v521, %v533
  %v542 = vadd.f32 %v522, %v534
  %v543 = vadd.f32 %v523, %v535
  %v544 = vadd.f32 %v524, %v536
  %v545 = vadd.f32 %v525, %v537
  %v546 = vadd.f32 %v526, %v538
  %v547 = vadd.f32 %v527, %v539
  %v548 = vadd.f32 %v540, %v143
  %v549 = vadd.f32 %v541, %v148
  %v550 = vadd.f32 %v542, %v153
  %v551 = vadd.f32 %v543, %v158
  %v552 = vadd.f32 %v544, %v163
  %v553 = vadd.f32 %v545, %v168
  %v554 = vadd.f32 %v546, %v173
  %v555 = vadd.f32 %v547, %v178
  %v556 = vmax.f32 %v548, 0.0
  %v557 = vmax.f32 %v549, 0.0
  %v558 = vmax.f32 %v550, 0.0
  %v559 = vmax.f32 %v551, 0.0
  %v560 = vmax.f32 %v552, 0.0
  %v561 = vmax.f32 %v553, 0.0
  %v562 = vmax.f32 %v554, 0.0
  %v563 = vmax.f32 %v555, 0.0
  %v564 = vpack.c.bf16 %v557, %v556
  %v565 = vpack.c.bf16 %v559, %v558
  %v566 = vpack.c.bf16 %v561, %v560
  %v567 = vpack.c.bf16 %v563, %v562
  %568 = vst [vmem:[#allocation2 + $0x30] sm:$0xff] %v564
  %569 = vst [vmem:[#allocation2 + $0x70] sm:$0xff] %v565
  %570 = vst [vmem:[#allocation2 + $0xb0] sm:$0xff] %v566
  %571 = vst [vmem:[#allocation2 + $0xf0] sm:$0xff] %v567
  %v572 = vlaneseq
  %v573 = vshrl.u32 %v572, 7
  %v574 = vsub.s32 7, %v573
  %v575 = vrot.slane %v34, %v574
  %v576 = vmul.f32 %v47, %v575
  %v577 = vmul.f32 %v52, %v575
  %v578 = vmul.f32 %v57, %v575
  %v579 = vmul.f32 %v62, %v575
  %v580 = vmul.f32 %v67, %v575
  %v581 = vmul.f32 %v72, %v575
  %v582 = vmul.f32 %v77, %v575
  %v583 = vmul.f32 %v82, %v575
  %v584 = vlaneseq
  %v585 = vshrl.u32 %v584, 7
  %v586 = vsub.s32 7, %v585
  %v587 = vrot.slane %v35, %v586
  %v588 = vmul.f32 %v95, %v587
  %v589 = vmul.f32 %v100, %v587
  %v590 = vmul.f32 %v105, %v587
  %v591 = vmul.f32 %v110, %v587
  %v592 = vmul.f32 %v115, %v587
  %v593 = vmul.f32 %v120, %v587
  %v594 = vmul.f32 %v125, %v587
  %v595 = vmul.f32 %v130, %v587
  %v596 = vadd.f32 %v576, %v588
  %v597 = vadd.f32 %v577, %v589
  %v598 = vadd.f32 %v578, %v590
  %v599 = vadd.f32 %v579, %v591
  %v600 = vadd.f32 %v580, %v592
  %v601 = vadd.f32 %v581, %v593
  %v602 = vadd.f32 %v582, %v594
  %v603 = vadd.f32 %v583, %v595
  %v604 = vadd.f32 %v596, %v143
  %v605 = vadd.f32 %v597, %v148
  %v606 = vadd.f32 %v598, %v153
  %v607 = vadd.f32 %v599, %v158
  %v608 = vadd.f32 %v600, %v163
  %v609 = vadd.f32 %v601, %v168
  %v610 = vadd.f32 %v602, %v173
  %v611 = vadd.f32 %v603, %v178
  %v612 = vmax.f32 %v604, 0.0
  %v613 = vmax.f32 %v605, 0.0
  %v614 = vmax.f32 %v606, 0.0
  %v615 = vmax.f32 %v607, 0.0
  %v616 = vmax.f32 %v608, 0.0
  %v617 = vmax.f32 %v609, 0.0
  %v618 = vmax.f32 %v610, 0.0
  %v619 = vmax.f32 %v611, 0.0
  %v620 = vpack.c.bf16 %v613, %v612
  %v621 = vpack.c.bf16 %v615, %v614
  %v622 = vpack.c.bf16 %v617, %v616
  %v623 = vpack.c.bf16 %v619, %v618
  %624 = vst [vmem:[#allocation2 + $0x38] sm:$0xff] %v620
  %625 = vst [vmem:[#allocation2 + $0x78] sm:$0xff] %v621
  %626 = vst [vmem:[#allocation2 + $0xb8] sm:$0xff] %v622
  %627 = vst [vmem:[#allocation2 + $0xf8] sm:$0xff] %v623
  %v628 = vld [vmem:[%s4] sm:$0xf]
  %v629 = vld [vmem:[%s4 + $0x4] sm:$0xf]
  %v630 = vld [vmem:[%s4 + $0x8] sm:$0xf]
  %v631 = vld [vmem:[%s4 + $0xc] sm:$0xf]
  %v632 = vld [vmem:[%s4 + $0x10] sm:$0xf]
  %v633 = vld [vmem:[%s4 + $0x14] sm:$0xf]
  %v634 = vld [vmem:[%s4 + $0x18] sm:$0xf]
  %v635 = vld [vmem:[%s4 + $0x1c] sm:$0xf]
  %v636 = vld [vmem:[%s5] sm:$0xff]
  %v637 = vld [vmem:[%s5 + $0x8] sm:$0xff]
  %v638 = vld [vmem:[%s5 + $0x10] sm:$0xff]
  %v639 = vld [vmem:[%s5 + $0x18] sm:$0xff]
  %v640 = vld [vmem:[%s5 + $0x20] sm:$0xff]
  %v641 = vld [vmem:[%s5 + $0x28] sm:$0xff]
  %v642 = vld [vmem:[%s5 + $0x30] sm:$0xff]
  %v643 = vld [vmem:[%s5 + $0x38] sm:$0xff]
  %v644 = vld [vmem:[#allocation2] sm:$0xff]
  %v645 = vld [vmem:[#allocation2 + $0x8] sm:$0xff]
  %v646 = vld [vmem:[#allocation2 + $0x10] sm:$0xff]
  %v647 = vld [vmem:[#allocation2 + $0x18] sm:$0xff]
  %v648 = vld [vmem:[#allocation2 + $0x20] sm:$0xff]
  %v649 = vld [vmem:[#allocation2 + $0x28] sm:$0xff]
  %v650 = vld [vmem:[#allocation2 + $0x30] sm:$0xff]
  %v651 = vld [vmem:[#allocation2 + $0x38] sm:$0xff]
  %v652 = vld [vmem:[#allocation2 + $0x40] sm:$0xff]
  %v653 = vld [vmem:[#allocation2 + $0x48] sm:$0xff]
  %v654 = vld [vmem:[#allocation2 + $0x50] sm:$0xff]
  %v655 = vld [vmem:[#allocation2 + $0x58] sm:$0xff]
  %v656 = vld [vmem:[#allocation2 + $0x60] sm:$0xff]
  %v657 = vld [vmem:[#allocation2 + $0x68] sm:$0xff]
  %v658 = vld [vmem:[#allocation2 + $0x70] sm:$0xff]
  %v659 = vld [vmem:[#allocation2 + $0x78] sm:$0xff]
  %v660 = vld [vmem:[#allocation2 + $0x80] sm:$0xff]
  %v661 = vld [vmem:[#allocation2 + $0x88] sm:$0xff]
  %v662 = vld [vmem:[#allocation2 + $0x90] sm:$0xff]
  %v663 = vld [vmem:[#allocation2 + $0x98] sm:$0xff]
  %v664 = vld [vmem:[#allocation2 + $0xa0] sm:$0xff]
  %v665 = vld [vmem:[#allocation2 + $0xa8] sm:$0xff]
  %v666 = vld [vmem:[#allocation2 + $0xb0] sm:$0xff]
  %v667 = vld [vmem:[#allocation2 + $0xb8] sm:$0xff]
  %v668 = vld [vmem:[#allocation2 + $0xc0] sm:$0xff]
  %v669 = vld [vmem:[#allocation2 + $0xc8] sm:$0xff]
  %v670 = vld [vmem:[#allocation2 + $0xd0] sm:$0xff]
  %v671 = vld [vmem:[#allocation2 + $0xd8] sm:$0xff]
  %v672 = vld [vmem:[#allocation2 + $0xe0] sm:$0xff]
  %v673 = vld [vmem:[#allocation2 + $0xe8] sm:$0xff]
  %v674 = vld [vmem:[#allocation2 + $0xf0] sm:$0xff]
  %v675 = vld [vmem:[#allocation2 + $0xf8] sm:$0xff]
  %677 = vset.pattern.permute.xlu0 0
  %678 = vperm.xlu0 %677, %v636
  %v679 = vpop.permute.xlu0 %678
  %682 = vset.pattern.permute.xlu0 0
  %683 = vperm.xlu0 %682, %v637
  %v684 = vpop.permute.xlu0 %683
  %687 = vset.pattern.permute.xlu0 0
  %688 = vperm.xlu0 %687, %v638
  %v689 = vpop.permute.xlu0 %688
  %692 = vset.pattern.permute.xlu0 0
  %693 = vperm.xlu0 %692, %v639
  %v694 = vpop.permute.xlu0 %693
  %697 = vset.pattern.permute.xlu0 0
  %698 = vperm.xlu0 %697, %v640
  %v699 = vpop.permute.xlu0 %698
  %702 = vset.pattern.permute.xlu0 0
  %703 = vperm.xlu0 %702, %v641
  %v704 = vpop.permute.xlu0 %703
  %707 = vset.pattern.permute.xlu0 0
  %708 = vperm.xlu0 %707, %v642
  %v709 = vpop.permute.xlu0 %708
  %712 = vset.pattern.permute.xlu0 0
  %713 = vperm.xlu0 %712, %v643
  %v714 = vpop.permute.xlu0 %713
  %v724 = vunpack.c.l.b16 %v628
  %v725 = vunpack.c.l.b16 %v629
  %v726 = vunpack.c.l.b16 %v630
  %v727 = vunpack.c.l.b16 %v631
  %v728 = vunpack.c.l.b16 %v632
  %v729 = vunpack.c.l.b16 %v633
  %v730 = vunpack.c.l.b16 %v634
  %v731 = vunpack.c.l.b16 %v635
  %v732 = vpack.c.b16 %v725, %v724
  %v733 = vpack.c.b16 %v727, %v726
  %v734 = vpack.c.b16 %v729, %v728
  %v735 = vpack.c.b16 %v731, %v730
  %vm736 = vcmask 523264
  %v738 = vsel %vm736, %v732, 0
  %v741 = vsel %vm736, %v733, 0
  %v744 = vsel %vm736, %v734, 0
  %v747 = vsel %vm736, %v735, 0
  %749 = vmatprep.subr.bf16.mxu0 %v645
  %750 = vmatpush1.bf16.msra.mxu0 %v644
  %751 = vmatprep.subr.bf16.mxu0 %v653
  %752 = vmatpush1.bf16.msra.mxu0 %v652
  %753 = vmatprep.subr.bf16.mxu0 %v661
  %754 = vmatpush1.bf16.msra.mxu0 %v660
  %755 = vmatprep.subr.bf16.mxu0 %v669
  %756 = vmatpush1.bf16.msra.mxu0 %v668
  %757 = vmatprep.subr.bf16.mxu0 0
  %758 = vmatpush1.bf16.msra.mxu0 0
  %759 = vmatprep.subr.bf16.mxu0 0
  %760 = vmatpush1.bf16.msra.mxu0 0
  %761 = vmatprep.subr.bf16.mxu0 0
  %762 = vmatpush1.bf16.msra.mxu0 0
  %763 = vmatprep.subr.bf16.mxu0 0
  %764 = vmatpush1.bf16.msra.mxu0 0
  %765 = vmatprep.subr.bf16.mxu0 0
  %766 = vmatpush1.bf16.msra.mxu0 0
  %767 = vmatprep.subr.bf16.mxu0 0
  %768 = vmatpush1.bf16.msra.mxu0 0
  %769 = vmatprep.subr.bf16.mxu0 0
  %770 = vmatpush1.bf16.msra.mxu0 0
  %771 = vmatprep.subr.bf16.mxu0 0
  %772 = vmatpush1.bf16.msra.mxu0 0
  %773 = vmatprep.subr.bf16.mxu0 0
  %774 = vmatpush1.bf16.msra.mxu0 0
  %775 = vmatprep.subr.bf16.mxu0 0
  %776 = vmatpush1.bf16.msra.mxu0 0
  %777 = vmatprep.subr.bf16.mxu0 0
  %778 = vmatpush1.bf16.msra.mxu0 0
  %779 = vmatprep.subr.bf16.mxu0 0
  %780 = vmatpush1.bf16.msra.mxu0 0
  %781 = vmatprep.mubr.bf16.mxu0 0
  %782 = vmatmul.mubr.bf16.gmra.mrb[0].mxu0 %v738
  %v783 = vpop.f32.mrb[0].mxu0
  %v784 = vadd.f32 %v679, %v783
  %v785 = vpop.f32.mrb[0].mxu0
  %v786 = vadd.f32 %v679, %v785
  %v787 = vpop.f32.mrb[0].mxu0
  %v788 = vadd.f32 %v684, %v787
  %v789 = vpop.f32.mrb[0].mxu0
  %v790 = vadd.f32 %v684, %v789
  %791 = vmatprep.mubr.bf16.mxu0 0
  %792 = vmatmul.mubr.bf16.gmra.mrb[0].mxu0 %v741
  %v793 = vpop.f32.mrb[0].mxu0
  %v794 = vadd.f32 %v689, %v793
  %v795 = vpop.f32.mrb[0].mxu0
  %v796 = vadd.f32 %v689, %v795
  %v797 = vpop.f32.mrb[0].mxu0
  %v798 = vadd.f32 %v694, %v797
  %v799 = vpop.f32.mrb[0].mxu0
  %v800 = vadd.f32 %v694, %v799
  %801 = vmatprep.mubr.bf16.mxu0 0
  %802 = vmatmul.mubr.bf16.gmra.mrb[0].mxu0 %v744
  %v803 = vpop.f32.mrb[0].mxu0
  %v804 = vadd.f32 %v699, %v803
  %v805 = vpop.f32.mrb[0].mxu0
  %v806 = vadd.f32 %v699, %v805
  %v807 = vpop.f32.mrb[0].mxu0
  %v808 = vadd.f32 %v704, %v807
  %v809 = vpop.f32.mrb[0].mxu0
  %v810 = vadd.f32 %v704, %v809
  %811 = vmatprep.mubr.bf16.mxu0 0
  %812 = vmatmul.mubr.bf16.gmra.mrb[0].mxu0 %v747
  %v813 = vpop.f32.mrb[0].mxu0
  %v814 = vadd.f32 %v709, %v813
  %v815 = vpop.f32.mrb[0].mxu0
  %v816 = vadd.f32 %v709, %v815
  %v817 = vpop.f32.mrb[0].mxu0
  %v818 = vadd.f32 %v714, %v817
  %v819 = vpop.f32.mrb[0].mxu0
  %v820 = vadd.f32 %v714, %v819
  %821 = vdwg.mxu0
  %822 = vmatprep.subr.bf16.mxu0 %v647
  %823 = vmatpush1.bf16.msra.mxu0 %v646
  %824 = vmatprep.subr.bf16.mxu0 %v655
  %825 = vmatpush1.bf16.msra.mxu0 %v654
  %826 = vmatprep.subr.bf16.mxu0 %v663
  %827 = vmatpush1.bf16.msra.mxu0 %v662
  %828 = vmatprep.subr.bf16.mxu0 %v671
  %829 = vmatpush1.bf16.msra.mxu0 %v670
  %830 = vmatprep.subr.bf16.mxu0 0
  %831 = vmatpush1.bf16.msra.mxu0 0
  %832 = vmatprep.subr.bf16.mxu0 0
  %833 = vmatpush1.bf16.msra.mxu0 0
  %834 = vmatprep.subr.bf16.mxu0 0
  %835 = vmatpush1.bf16.msra.mxu0 0
  %836 = vmatprep.subr.bf16.mxu0 0
  %837 = vmatpush1.bf16.msra.mxu0 0
  %838 = vmatprep.subr.bf16.mxu0 0
  %839 = vmatpush1.bf16.msra.mxu0 0
  %840 = vmatprep.subr.bf16.mxu0 0
  %841 = vmatpush1.bf16.msra.mxu0 0
  %842 = vmatprep.subr.bf16.mxu0 0
  %843 = vmatpush1.bf16.msra.mxu0 0
  %844 = vmatprep.subr.bf16.mxu0 0
  %845 = vmatpush1.bf16.msra.mxu0 0
  %846 = vmatprep.subr.bf16.mxu0 0
  %847 = vmatpush1.bf16.msra.mxu0 0
  %848 = vmatprep.subr.bf16.mxu0 0
  %849 = vmatpush1.bf16.msra.mxu0 0
  %850 = vmatprep.subr.bf16.mxu0 0
  %851 = vmatpush1.bf16.msra.mxu0 0
  %852 = vmatprep.subr.bf16.mxu0 0
  %853 = vmatpush1.bf16.msra.mxu0 0
  %854 = vmatprep.mubr.bf16.mxu0 0
  %855 = vmatmul.mubr.bf16.gmra.mrb[0].mxu0 %v738
  %v856 = vpop.f32.mrb[0].mxu0
  %v857 = vadd.f32 %v679, %v856
  %v858 = vpop.f32.mrb[0].mxu0
  %v859 = vadd.f32 %v679, %v858
  %v860 = vpop.f32.mrb[0].mxu0
  %v861 = vadd.f32 %v684, %v860
  %v862 = vpop.f32.mrb[0].mxu0
  %v863 = vadd.f32 %v684, %v862
  %864 = vmatprep.mubr.bf16.mxu0 0
  %865 = vmatmul.mubr.bf16.gmra.mrb[0].mxu0 %v741
  %v866 = vpop.f32.mrb[0].mxu0
  %v867 = vadd.f32 %v689, %v866
  %v868 = vpop.f32.mrb[0].mxu0
  %v869 = vadd.f32 %v689, %v868
  %v870 = vpop.f32.mrb[0].mxu0
  %v871 = vadd.f32 %v694, %v870
  %v872 = vpop.f32.mrb[0].mxu0
  %v873 = vadd.f32 %v694, %v872
  %874 = vmatprep.mubr.bf16.mxu0 0
  %875 = vmatmul.mubr.bf16.gmra.mrb[0].mxu0 %v744
  %v876 = vpop.f32.mrb[0].mxu0
  %v877 = vadd.f32 %v699, %v876
  %v878 = vpop.f32.mrb[0].mxu0
  %v879 = vadd.f32 %v699, %v878
  %v880 = vpop.f32.mrb[0].mxu0
  %v881 = vadd.f32 %v704, %v880
  %v882 = vpop.f32.mrb[0].mxu0
  %v883 = vadd.f32 %v704, %v882
  %884 = vmatprep.mubr.bf16.mxu0 0
  %885 = vmatmul.mubr.bf16.gmra.mrb[0].mxu0 %v747
  %v886 = vpop.f32.mrb[0].mxu0
  %v887 = vadd.f32 %v709, %v886
  %v888 = vpop.f32.mrb[0].mxu0
  %v889 = vadd.f32 %v709, %v888
  %v890 = vpop.f32.mrb[0].mxu0
  %v891 = vadd.f32 %v714, %v890
  %v892 = vpop.f32.mrb[0].mxu0
  %v893 = vadd.f32 %v714, %v892
  %894 = vdwg.mxu0
  %895 = vmatprep.subr.bf16.mxu0 %v649
  %896 = vmatpush1.bf16.msra.mxu0 %v648
  %897 = vmatprep.subr.bf16.mxu0 %v657
  %898 = vmatpush1.bf16.msra.mxu0 %v656
  %899 = vmatprep.subr.bf16.mxu0 %v665
  %900 = vmatpush1.bf16.msra.mxu0 %v664
  %901 = vmatprep.subr.bf16.mxu0 %v673
  %902 = vmatpush1.bf16.msra.mxu0 %v672
  %903 = vmatprep.subr.bf16.mxu0 0
  %904 = vmatpush1.bf16.msra.mxu0 0
  %905 = vmatprep.subr.bf16.mxu0 0
  %906 = vmatpush1.bf16.msra.mxu0 0
  %907 = vmatprep.subr.bf16.mxu0 0
  %908 = vmatpush1.bf16.msra.mxu0 0
  %909 = vmatprep.subr.bf16.mxu0 0
  %910 = vmatpush1.bf16.msra.mxu0 0
  %911 = vmatprep.subr.bf16.mxu0 0
  %912 = vmatpush1.bf16.msra.mxu0 0
  %913 = vmatprep.subr.bf16.mxu0 0
  %914 = vmatpush1.bf16.msra.mxu0 0
  %915 = vmatprep.subr.bf16.mxu0 0
  %916 = vmatpush1.bf16.msra.mxu0 0
  %917 = vmatprep.subr.bf16.mxu0 0
  %918 = vmatpush1.bf16.msra.mxu0 0
  %919 = vmatprep.subr.bf16.mxu0 0
  %920 = vmatpush1.bf16.msra.mxu0 0
  %921 = vmatprep.subr.bf16.mxu0 0
  %922 = vmatpush1.bf16.msra.mxu0 0
  %923 = vmatprep.subr.bf16.mxu0 0
  %924 = vmatpush1.bf16.msra.mxu0 0
  %925 = vmatprep.subr.bf16.mxu0 0
  %926 = vmatpush1.bf16.msra.mxu0 0
  %927 = vmatprep.mubr.bf16.mxu0 0
  %928 = vmatmul.mubr.bf16.gmra.mrb[0].mxu0 %v738
  %v929 = vpop.f32.mrb[0].mxu0
  %v930 = vadd.f32 %v679, %v929
  %v931 = vpop.f32.mrb[0].mxu0
  %v932 = vadd.f32 %v679, %v931
  %v933 = vpop.f32.mrb[0].mxu0
  %v934 = vadd.f32 %v684, %v933
  %v935 = vpop.f32.mrb[0].mxu0
  %v936 = vadd.f32 %v684, %v935
  %937 = vmatprep.mubr.bf16.mxu0 0
  %938 = vmatmul.mubr.bf16.gmra.mrb[0].mxu0 %v741
  %v939 = vpop.f32.mrb[0].mxu0
  %v940 = vadd.f32 %v689, %v939
  %v941 = vpop.f32.mrb[0].mxu0
  %v942 = vadd.f32 %v689, %v941
  %v943 = vpop.f32.mrb[0].mxu0
  %v944 = vadd.f32 %v694, %v943
  %v945 = vpop.f32.mrb[0].mxu0
  %v946 = vadd.f32 %v694, %v945
  %947 = vmatprep.mubr.bf16.mxu0 0
  %948 = vmatmul.mubr.bf16.gmra.mrb[0].mxu0 %v744
  %v949 = vpop.f32.mrb[0].mxu0
  %v950 = vadd.f32 %v699, %v949
  %v951 = vpop.f32.mrb[0].mxu0
  %v952 = vadd.f32 %v699, %v951
  %v953 = vpop.f32.mrb[0].mxu0
  %v954 = vadd.f32 %v704, %v953
  %v955 = vpop.f32.mrb[0].mxu0
  %v956 = vadd.f32 %v704, %v955
  %957 = vmatprep.mubr.bf16.mxu0 0
  %958 = vmatmul.mubr.bf16.gmra.mrb[0].mxu0 %v747
  %v959 = vpop.f32.mrb[0].mxu0
  %v960 = vadd.f32 %v709, %v959
  %v961 = vpop.f32.mrb[0].mxu0
  %v962 = vadd.f32 %v709, %v961
  %v963 = vpop.f32.mrb[0].mxu0
  %v964 = vadd.f32 %v714, %v963
  %v965 = vpop.f32.mrb[0].mxu0
  %v966 = vadd.f32 %v714, %v965
  %967 = vdwg.mxu0
  %968 = vmatprep.subr.bf16.mxu0 %v651
  %969 = vmatpush1.bf16.msra.mxu0 %v650
  %970 = vmatprep.subr.bf16.mxu0 %v659
  %971 = vmatpush1.bf16.msra.mxu0 %v658
  %972 = vmatprep.subr.bf16.mxu0 %v667
  %973 = vmatpush1.bf16.msra.mxu0 %v666
  %974 = vmatprep.subr.bf16.mxu0 %v675
  %975 = vmatpush1.bf16.msra.mxu0 %v674
  %976 = vmatprep.subr.bf16.mxu0 0
  %977 = vmatpush1.bf16.msra.mxu0 0
  %978 = vmatprep.subr.bf16.mxu0 0
  %979 = vmatpush1.bf16.msra.mxu0 0
  %980 = vmatprep.subr.bf16.mxu0 0
  %981 = vmatpush1.bf16.msra.mxu0 0
  %982 = vmatprep.subr.bf16.mxu0 0
  %983 = vmatpush1.bf16.msra.mxu0 0
  %984 = vmatprep.subr.bf16.mxu0 0
  %985 = vmatpush1.bf16.msra.mxu0 0
  %986 = vmatprep.subr.bf16.mxu0 0
  %987 = vmatpush1.bf16.msra.mxu0 0
  %988 = vmatprep.subr.bf16.mxu0 0
  %989 = vmatpush1.bf16.msra.mxu0 0
  %990 = vmatprep.subr.bf16.mxu0 0
  %991 = vmatpush1.bf16.msra.mxu0 0
  %992 = vmatprep.subr.bf16.mxu0 0
  %993 = vmatpush1.bf16.msra.mxu0 0
  %994 = vmatprep.subr.bf16.mxu0 0
  %995 = vmatpush1.bf16.msra.mxu0 0
  %996 = vmatprep.subr.bf16.mxu0 0
  %997 = vmatpush1.bf16.msra.mxu0 0
  %998 = vmatprep.subr.bf16.mxu0 0
  %999 = vmatpush1.bf16.msra.mxu0 0
  %1000 = vmatprep.mubr.bf16.mxu0 0
  %1001 = vmatmul.mubr.bf16.gmra.mrb[0].mxu0 %v738
  %v1002 = vpop.f32.mrb[0].mxu0
  %v1003 = vadd.f32 %v679, %v1002
  %v1004 = vpop.f32.mrb[0].mxu0
  %v1005 = vadd.f32 %v679, %v1004
  %v1006 = vpop.f32.mrb[0].mxu0
  %v1007 = vadd.f32 %v684, %v1006
  %v1008 = vpop.f32.mrb[0].mxu0
  %v1009 = vadd.f32 %v684, %v1008
  %1010 = vmatprep.mubr.bf16.mxu0 0
  %1011 = vmatmul.mubr.bf16.gmra.mrb[0].mxu0 %v741
  %v1012 = vpop.f32.mrb[0].mxu0
  %v1013 = vadd.f32 %v689, %v1012
  %v1014 = vpop.f32.mrb[0].mxu0
  %v1015 = vadd.f32 %v689, %v1014
  %v1016 = vpop.f32.mrb[0].mxu0
  %v1017 = vadd.f32 %v694, %v1016
  %v1018 = vpop.f32.mrb[0].mxu0
  %v1019 = vadd.f32 %v694, %v1018
  %1020 = vmatprep.mubr.bf16.mxu0 0
  %1021 = vmatmul.mubr.bf16.gmra.mrb[0].mxu0 %v744
  %v1022 = vpop.f32.mrb[0].mxu0
  %v1023 = vadd.f32 %v699, %v1022
  %v1024 = vpop.f32.mrb[0].mxu0
  %v1025 = vadd.f32 %v699, %v1024
  %v1026 = vpop.f32.mrb[0].mxu0
  %v1027 = vadd.f32 %v704, %v1026
  %v1028 = vpop.f32.mrb[0].mxu0
  %v1029 = vadd.f32 %v704, %v1028
  %1030 = vmatprep.mubr.bf16.mxu0 0
  %1031 = vmatmul.mubr.bf16.gmra.mrb[0].mxu0 %v747
  %v1032 = vpop.f32.mrb[0].mxu0
  %v1033 = vadd.f32 %v709, %v1032
  %v1034 = vpop.f32.mrb[0].mxu0
  %v1035 = vadd.f32 %v709, %v1034
  %v1036 = vpop.f32.mrb[0].mxu0
  %v1037 = vadd.f32 %v714, %v1036
  %v1038 = vpop.f32.mrb[0].mxu0
  %v1039 = vadd.f32 %v714, %v1038
  %1040 = vdwg.mxu0
  %v1041 = vmax.f32 %v784, 0.0
  %v1042 = vmax.f32 %v786, 0.0
  %v1043 = vmax.f32 %v857, 0.0
  %v1044 = vmax.f32 %v859, 0.0
  %v1045 = vmax.f32 %v930, 0.0
  %v1046 = vmax.f32 %v932, 0.0
  %v1047 = vmax.f32 %v1003, 0.0
  %v1048 = vmax.f32 %v1005, 0.0
  %v1049 = vmax.f32 %v788, 0.0
  %v1050 = vmax.f32 %v790, 0.0
  %v1051 = vmax.f32 %v861, 0.0
  %v1052 = vmax.f32 %v863, 0.0
  %v1053 = vmax.f32 %v934, 0.0
  %v1054 = vmax.f32 %v936, 0.0
  %v1055 = vmax.f32 %v1007, 0.0
  %v1056 = vmax.f32 %v1009, 0.0
  %v1057 = vmax.f32 %v794, 0.0
  %v1058 = vmax.f32 %v796, 0.0
  %v1059 = vmax.f32 %v867, 0.0
  %v1060 = vmax.f32 %v869, 0.0
  %v1061 = vmax.f32 %v940, 0.0
  %v1062 = vmax.f32 %v942, 0.0
  %v1063 = vmax.f32 %v1013, 0.0
  %v1064 = vmax.f32 %v1015, 0.0
  %v1065 = vmax.f32 %v798, 0.0
  %v1066 = vmax.f32 %v800, 0.0
  %v1067 = vmax.f32 %v871, 0.0
  %v1068 = vmax.f32 %v873, 0.0
  %v1069 = vmax.f32 %v944, 0.0
  %v1070 = vmax.f32 %v946, 0.0
  %v1071 = vmax.f32 %v1017, 0.0
  %v1072 = vmax.f32 %v1019, 0.0
  %v1073 = vmax.f32 %v804, 0.0
  %v1074 = vmax.f32 %v806, 0.0
  %v1075 = vmax.f32 %v877, 0.0
  %v1076 = vmax.f32 %v879, 0.0
  %v1077 = vmax.f32 %v950, 0.0
  %v1078 = vmax.f32 %v952, 0.0
  %v1079 = vmax.f32 %v1023, 0.0
  %v1080 = vmax.f32 %v1025, 0.0
  %v1081 = vmax.f32 %v808, 0.0
  %v1082 = vmax.f32 %v810, 0.0
  %v1083 = vmax.f32 %v881, 0.0
  %v1084 = vmax.f32 %v883, 0.0
  %v1085 = vmax.f32 %v954, 0.0
  %v1086 = vmax.f32 %v956, 0.0
  %v1087 = vmax.f32 %v1027, 0.0
  %v1088 = vmax.f32 %v1029, 0.0
  %v1089 = vmax.f32 %v814, 0.0
  %v1090 = vmax.f32 %v816, 0.0
  %v1091 = vmax.f32 %v887, 0.0
  %v1092 = vmax.f32 %v889, 0.0
  %v1093 = vmax.f32 %v960, 0.0
  %v1094 = vmax.f32 %v962, 0.0
  %v1095 = vmax.f32 %v1033, 0.0
  %v1096 = vmax.f32 %v1035, 0.0
  %v1097 = vmax.f32 %v818, 0.0
  %v1098 = vmax.f32 %v820, 0.0
  %v1099 = vmax.f32 %v891, 0.0
  %v1100 = vmax.f32 %v893, 0.0
  %v1101 = vmax.f32 %v964, 0.0
  %v1102 = vmax.f32 %v966, 0.0
  %v1103 = vmax.f32 %v1037, 0.0
  %v1104 = vmax.f32 %v1039, 0.0
  %v1105 = vpack.c.bf16 %v1049, %v1041
  %v1106 = vpack.c.bf16 %v1050, %v1042
  %v1107 = vpack.c.bf16 %v1051, %v1043
  %v1108 = vpack.c.bf16 %v1052, %v1044
  %v1109 = vpack.c.bf16 %v1053, %v1045
  %v1110 = vpack.c.bf16 %v1054, %v1046
  %v1111 = vpack.c.bf16 %v1055, %v1047
  %v1112 = vpack.c.bf16 %v1056, %v1048
  %v1113 = vpack.c.bf16 %v1065, %v1057
  %v1114 = vpack.c.bf16 %v1066, %v1058
  %v1115 = vpack.c.bf16 %v1067, %v1059
  %v1116 = vpack.c.bf16 %v1068, %v1060
  %v1117 = vpack.c.bf16 %v1069, %v1061
  %v1118 = vpack.c.bf16 %v1070, %v1062
  %v1119 = vpack.c.bf16 %v1071, %v1063
  %v1120 = vpack.c.bf16 %v1072, %v1064
  %v1121 = vpack.c.bf16 %v1081, %v1073
  %v1122 = vpack.c.bf16 %v1082, %v1074
  %v1123 = vpack.c.bf16 %v1083, %v1075
  %v1124 = vpack.c.bf16 %v1084, %v1076
  %v1125 = vpack.c.bf16 %v1085, %v1077
  %v1126 = vpack.c.bf16 %v1086, %v1078
  %v1127 = vpack.c.bf16 %v1087, %v1079
  %v1128 = vpack.c.bf16 %v1088, %v1080
  %v1129 = vpack.c.bf16 %v1097, %v1089
  %v1130 = vpack.c.bf16 %v1098, %v1090
  %v1131 = vpack.c.bf16 %v1099, %v1091
  %v1132 = vpack.c.bf16 %v1100, %v1092
  %v1133 = vpack.c.bf16 %v1101, %v1093
  %v1134 = vpack.c.bf16 %v1102, %v1094
  %v1135 = vpack.c.bf16 %v1103, %v1095
  %v1136 = vpack.c.bf16 %v1104, %v1096
  %1137 = vst [vmem:[#allocation2] sm:$0xff] %v1105
  %1138 = vst [vmem:[#allocation2 + $0x8] sm:$0xff] %v1106
  %1139 = vst [vmem:[#allocation2 + $0x10] sm:$0xff] %v1107
  %1140 = vst [vmem:[#allocation2 + $0x18] sm:$0xff] %v1108
  %1141 = vst [vmem:[#allocation2 + $0x20] sm:$0xff] %v1109
  %1142 = vst [vmem:[#allocation2 + $0x28] sm:$0xff] %v1110
  %1143 = vst [vmem:[#allocation2 + $0x30] sm:$0xff] %v1111
  %1144 = vst [vmem:[#allocation2 + $0x38] sm:$0xff] %v1112
  %1145 = vst [vmem:[#allocation2 + $0x40] sm:$0xff] %v1113
  %1146 = vst [vmem:[#allocation2 + $0x48] sm:$0xff] %v1114
  %1147 = vst [vmem:[#allocation2 + $0x50] sm:$0xff] %v1115
  %1148 = vst [vmem:[#allocation2 + $0x58] sm:$0xff] %v1116
  %1149 = vst [vmem:[#allocation2 + $0x60] sm:$0xff] %v1117
  %1150 = vst [vmem:[#allocation2 + $0x68] sm:$0xff] %v1118
  %1151 = vst [vmem:[#allocation2 + $0x70] sm:$0xff] %v1119
  %1152 = vst [vmem:[#allocation2 + $0x78] sm:$0xff] %v1120
  %1153 = vst [vmem:[#allocation2 + $0x80] sm:$0xff] %v1121
  %1154 = vst [vmem:[#allocation2 + $0x88] sm:$0xff] %v1122
  %1155 = vst [vmem:[#allocation2 + $0x90] sm:$0xff] %v1123
  %1156 = vst [vmem:[#allocation2 + $0x98] sm:$0xff] %v1124
  %1157 = vst [vmem:[#allocation2 + $0xa0] sm:$0xff] %v1125
  %1158 = vst [vmem:[#allocation2 + $0xa8] sm:$0xff] %v1126
  %1159 = vst [vmem:[#allocation2 + $0xb0] sm:$0xff] %v1127
  %1160 = vst [vmem:[#allocation2 + $0xb8] sm:$0xff] %v1128
  %1161 = vst [vmem:[#allocation2 + $0xc0] sm:$0xff] %v1129
  %1162 = vst [vmem:[#allocation2 + $0xc8] sm:$0xff] %v1130
  %1163 = vst [vmem:[#allocation2 + $0xd0] sm:$0xff] %v1131
  %1164 = vst [vmem:[#allocation2 + $0xd8] sm:$0xff] %v1132
  %1165 = vst [vmem:[#allocation2 + $0xe0] sm:$0xff] %v1133
  %1166 = vst [vmem:[#allocation2 + $0xe8] sm:$0xff] %v1134
  %1167 = vst [vmem:[#allocation2 + $0xf0] sm:$0xff] %v1135
  %1168 = vst [vmem:[#allocation2 + $0xf8] sm:$0xff] %v1136
  %v1169 = vld [vmem:[%s6] sm:$0xf]
  %v1170 = vld [vmem:[%s6 + $0x4] sm:$0xf]
  %v1171 = vld [vmem:[%s6 + $0x8] sm:$0xf]
  %v1172 = vld [vmem:[%s6 + $0xc] sm:$0xf]
  %v1173 = vld [vmem:[%s7] sm:$0xff]
  %v1174 = vld [vmem:[%s7 + $0x8] sm:$0xff]
  %v1175 = vld [vmem:[%s7 + $0x10] sm:$0xff]
  %v1176 = vld [vmem:[%s7 + $0x18] sm:$0xff]
  %1178 = vset.pattern.permute.xlu0 0
  %1179 = vperm.xlu0 %1178, %v1173
  %v1180 = vpop.permute.xlu0 %1179
  %1183 = vset.pattern.permute.xlu0 0
  %1184 = vperm.xlu0 %1183, %v1174
  %v1185 = vpop.permute.xlu0 %1184
  %1188 = vset.pattern.permute.xlu0 0
  %1189 = vperm.xlu0 %1188, %v1175
  %v1190 = vpop.permute.xlu0 %1189
  %1193 = vset.pattern.permute.xlu0 0
  %1194 = vperm.xlu0 %1193, %v1176
  %v1195 = vpop.permute.xlu0 %1194
  %v1197 = vld [vmem:[#allocation2] sm:$0xff]
  %v1198 = vld [vmem:[#allocation2 + $0x8] sm:$0xff]
  %v1199 = vld [vmem:[#allocation2 + $0x10] sm:$0xff]
  %v1200 = vld [vmem:[#allocation2 + $0x18] sm:$0xff]
  %v1201 = vld [vmem:[#allocation2 + $0x20] sm:$0xff]
  %v1202 = vld [vmem:[#allocation2 + $0x28] sm:$0xff]
  %v1203 = vld [vmem:[#allocation2 + $0x30] sm:$0xff]
  %v1204 = vld [vmem:[#allocation2 + $0x38] sm:$0xff]
  %v1205 = vld [vmem:[#allocation2 + $0x40] sm:$0xff]
  %v1206 = vld [vmem:[#allocation2 + $0x48] sm:$0xff]
  %v1207 = vld [vmem:[#allocation2 + $0x50] sm:$0xff]
  %v1208 = vld [vmem:[#allocation2 + $0x58] sm:$0xff]
  %v1209 = vld [vmem:[#allocation2 + $0x60] sm:$0xff]
  %v1210 = vld [vmem:[#allocation2 + $0x68] sm:$0xff]
  %v1211 = vld [vmem:[#allocation2 + $0x70] sm:$0xff]
  %v1212 = vld [vmem:[#allocation2 + $0x78] sm:$0xff]
  %v1213 = vld [vmem:[#allocation2 + $0x80] sm:$0xff]
  %v1214 = vld [vmem:[#allocation2 + $0x88] sm:$0xff]
  %v1215 = vld [vmem:[#allocation2 + $0x90] sm:$0xff]
  %v1216 = vld [vmem:[#allocation2 + $0x98] sm:$0xff]
  %v1217 = vld [vmem:[#allocation2 + $0xa0] sm:$0xff]
  %v1218 = vld [vmem:[#allocation2 + $0xa8] sm:$0xff]
  %v1219 = vld [vmem:[#allocation2 + $0xb0] sm:$0xff]
  %v1220 = vld [vmem:[#allocation2 + $0xb8] sm:$0xff]
  %v1221 = vld [vmem:[#allocation2 + $0xc0] sm:$0xff]
  %v1222 = vld [vmem:[#allocation2 + $0xc8] sm:$0xff]
  %v1223 = vld [vmem:[#allocation2 + $0xd0] sm:$0xff]
  %v1224 = vld [vmem:[#allocation2 + $0xd8] sm:$0xff]
  %v1225 = vld [vmem:[#allocation2 + $0xe0] sm:$0xff]
  %v1226 = vld [vmem:[#allocation2 + $0xe8] sm:$0xff]
  %v1227 = vld [vmem:[#allocation2 + $0xf0] sm:$0xff]
  %v1228 = vld [vmem:[#allocation2 + $0xf8] sm:$0xff]
  %v1233 = vunpack.c.l.b16 %v1169
  %v1234 = vunpack.c.l.b16 %v1170
  %v1235 = vunpack.c.l.b16 %v1171
  %v1236 = vunpack.c.l.b16 %v1172
  %v1237 = vpack.c.b16 %v1234, %v1233
  %v1238 = vpack.c.b16 %v1236, %v1235
  %v1240 = vsel %vm736, %v1237, 0
  %v1243 = vsel %vm736, %v1238, 0
  %1245 = vmatprep.subr.bf16.mxu0 %v1198
  %1246 = vmatpush1.bf16.msra.mxu0 %v1197
  %1247 = vmatprep.subr.bf16.mxu0 %v1206
  %1248 = vmatpush1.bf16.msra.mxu0 %v1205
  %1249 = vmatprep.subr.bf16.mxu0 %v1214
  %1250 = vmatpush1.bf16.msra.mxu0 %v1213
  %1251 = vmatprep.subr.bf16.mxu0 %v1222
  %1252 = vmatpush1.bf16.msra.mxu0 %v1221
  %1253 = vmatprep.subr.bf16.mxu0 0
  %1254 = vmatpush1.bf16.msra.mxu0 0
  %1255 = vmatprep.subr.bf16.mxu0 0
  %1256 = vmatpush1.bf16.msra.mxu0 0
  %1257 = vmatprep.subr.bf16.mxu0 0
  %1258 = vmatpush1.bf16.msra.mxu0 0
  %1259 = vmatprep.subr.bf16.mxu0 0
  %1260 = vmatpush1.bf16.msra.mxu0 0
  %1261 = vmatprep.subr.bf16.mxu0 0
  %1262 = vmatpush1.bf16.msra.mxu0 0
  %1263 = vmatprep.subr.bf16.mxu0 0
  %1264 = vmatpush1.bf16.msra.mxu0 0
  %1265 = vmatprep.subr.bf16.mxu0 0
  %1266 = vmatpush1.bf16.msra.mxu0 0
  %1267 = vmatprep.subr.bf16.mxu0 0
  %1268 = vmatpush1.bf16.msra.mxu0 0
  %1269 = vmatprep.subr.bf16.mxu0 0
  %1270 = vmatpush1.bf16.msra.mxu0 0
  %1271 = vmatprep.subr.bf16.mxu0 0
  %1272 = vmatpush1.bf16.msra.mxu0 0
  %1273 = vmatprep.subr.bf16.mxu0 0
  %1274 = vmatpush1.bf16.msra.mxu0 0
  %1275 = vmatprep.subr.bf16.mxu0 0
  %1276 = vmatpush1.bf16.msra.mxu0 0
  %1277 = vmatprep.mubr.bf16.mxu0 0
  %1278 = vmatmul.mubr.bf16.gmra.mrb[0].mxu0 %v1240
  %v1279 = vpop.f32.mrb[0].mxu0
  %v1280 = vadd.f32 0.0, %v1279
  %v1281 = vpop.f32.mrb[0].mxu0
  %v1282 = vadd.f32 0.0, %v1281
  %v1283 = vpop.f32.mrb[0].mxu0
  %v1284 = vadd.f32 0.0, %v1283
  %v1285 = vpop.f32.mrb[0].mxu0
  %v1286 = vadd.f32 0.0, %v1285
  %1287 = vmatprep.mubr.bf16.mxu0 0
  %1288 = vmatmul.mubr.bf16.gmra.mrb[0].mxu0 %v1243
  %v1289 = vpop.f32.mrb[0].mxu0
  %v1290 = vadd.f32 0.0, %v1289
  %v1291 = vpop.f32.mrb[0].mxu0
  %v1292 = vadd.f32 0.0, %v1291
  %v1293 = vpop.f32.mrb[0].mxu0
  %v1294 = vadd.f32 0.0, %v1293
  %v1295 = vpop.f32.mrb[0].mxu0
  %v1296 = vadd.f32 0.0, %v1295
  %1297 = vdwg.mxu0
  %1298 = vmatprep.subr.bf16.mxu0 %v1200
  %1299 = vmatpush1.bf16.msra.mxu0 %v1199
  %1300 = vmatprep.subr.bf16.mxu0 %v1208
  %1301 = vmatpush1.bf16.msra.mxu0 %v1207
  %1302 = vmatprep.subr.bf16.mxu0 %v1216
  %1303 = vmatpush1.bf16.msra.mxu0 %v1215
  %1304 = vmatprep.subr.bf16.mxu0 %v1224
  %1305 = vmatpush1.bf16.msra.mxu0 %v1223
  %1306 = vmatprep.subr.bf16.mxu0 0
  %1307 = vmatpush1.bf16.msra.mxu0 0
  %1308 = vmatprep.subr.bf16.mxu0 0
  %1309 = vmatpush1.bf16.msra.mxu0 0
  %1310 = vmatprep.subr.bf16.mxu0 0
  %1311 = vmatpush1.bf16.msra.mxu0 0
  %1312 = vmatprep.subr.bf16.mxu0 0
  %1313 = vmatpush1.bf16.msra.mxu0 0
  %1314 = vmatprep.subr.bf16.mxu0 0
  %1315 = vmatpush1.bf16.msra.mxu0 0
  %1316 = vmatprep.subr.bf16.mxu0 0
  %1317 = vmatpush1.bf16.msra.mxu0 0
  %1318 = vmatprep.subr.bf16.mxu0 0
  %1319 = vmatpush1.bf16.msra.mxu0 0
  %1320 = vmatprep.subr.bf16.mxu0 0
  %1321 = vmatpush1.bf16.msra.mxu0 0
  %1322 = vmatprep.subr.bf16.mxu0 0
  %1323 = vmatpush1.bf16.msra.mxu0 0
  %1324 = vmatprep.subr.bf16.mxu0 0
  %1325 = vmatpush1.bf16.msra.mxu0 0
  %1326 = vmatprep.subr.bf16.mxu0 0
  %1327 = vmatpush1.bf16.msra.mxu0 0
  %1328 = vmatprep.subr.bf16.mxu0 0
  %1329 = vmatpush1.bf16.msra.mxu0 0
  %1330 = vmatprep.mubr.bf16.mxu0 0
  %1331 = vmatmul.mubr.bf16.gmra.mrb[0].mxu0 %v1240
  %v1332 = vpop.f32.mrb[0].mxu0
  %v1333 = vadd.f32 0.0, %v1332
  %v1334 = vpop.f32.mrb[0].mxu0
  %v1335 = vadd.f32 0.0, %v1334
  %v1336 = vpop.f32.mrb[0].mxu0
  %v1337 = vadd.f32 0.0, %v1336
  %v1338 = vpop.f32.mrb[0].mxu0
  %v1339 = vadd.f32 0.0, %v1338
  %1340 = vmatprep.mubr.bf16.mxu0 0
  %1341 = vmatmul.mubr.bf16.gmra.mrb[0].mxu0 %v1243
  %v1342 = vpop.f32.mrb[0].mxu0
  %v1343 = vadd.f32 0.0, %v1342
  %v1344 = vpop.f32.mrb[0].mxu0
  %v1345 = vadd.f32 0.0, %v1344
  %v1346 = vpop.f32.mrb[0].mxu0
  %v1347 = vadd.f32 0.0, %v1346
  %v1348 = vpop.f32.mrb[0].mxu0
  %v1349 = vadd.f32 0.0, %v1348
  %1350 = vdwg.mxu0
  %1351 = vmatprep.subr.bf16.mxu0 %v1202
  %1352 = vmatpush1.bf16.msra.mxu0 %v1201
  %1353 = vmatprep.subr.bf16.mxu0 %v1210
  %1354 = vmatpush1.bf16.msra.mxu0 %v1209
  %1355 = vmatprep.subr.bf16.mxu0 %v1218
  %1356 = vmatpush1.bf16.msra.mxu0 %v1217
  %1357 = vmatprep.subr.bf16.mxu0 %v1226
  %1358 = vmatpush1.bf16.msra.mxu0 %v1225
  %1359 = vmatprep.subr.bf16.mxu0 0
  %1360 = vmatpush1.bf16.msra.mxu0 0
  %1361 = vmatprep.subr.bf16.mxu0 0
  %1362 = vmatpush1.bf16.msra.mxu0 0
  %1363 = vmatprep.subr.bf16.mxu0 0
  %1364 = vmatpush1.bf16.msra.mxu0 0
  %1365 = vmatprep.subr.bf16.mxu0 0
  %1366 = vmatpush1.bf16.msra.mxu0 0
  %1367 = vmatprep.subr.bf16.mxu0 0
  %1368 = vmatpush1.bf16.msra.mxu0 0
  %1369 = vmatprep.subr.bf16.mxu0 0
  %1370 = vmatpush1.bf16.msra.mxu0 0
  %1371 = vmatprep.subr.bf16.mxu0 0
  %1372 = vmatpush1.bf16.msra.mxu0 0
  %1373 = vmatprep.subr.bf16.mxu0 0
  %1374 = vmatpush1.bf16.msra.mxu0 0
  %1375 = vmatprep.subr.bf16.mxu0 0
  %1376 = vmatpush1.bf16.msra.mxu0 0
  %1377 = vmatprep.subr.bf16.mxu0 0
  %1378 = vmatpush1.bf16.msra.mxu0 0
  %1379 = vmatprep.subr.bf16.mxu0 0
  %1380 = vmatpush1.bf16.msra.mxu0 0
  %1381 = vmatprep.subr.bf16.mxu0 0
  %1382 = vmatpush1.bf16.msra.mxu0 0
  %1383 = vmatprep.mubr.bf16.mxu0 0
  %1384 = vmatmul.mubr.bf16.gmra.mrb[0].mxu0 %v1240
  %v1385 = vpop.f32.mrb[0].mxu0
  %v1386 = vadd.f32 0.0, %v1385
  %v1387 = vpop.f32.mrb[0].mxu0
  %v1388 = vadd.f32 0.0, %v1387
  %v1389 = vpop.f32.mrb[0].mxu0
  %v1390 = vadd.f32 0.0, %v1389
  %v1391 = vpop.f32.mrb[0].mxu0
  %v1392 = vadd.f32 0.0, %v1391
  %1393 = vmatprep.mubr.bf16.mxu0 0
  %1394 = vmatmul.mubr.bf16.gmra.mrb[0].mxu0 %v1243
  %v1395 = vpop.f32.mrb[0].mxu0
  %v1396 = vadd.f32 0.0, %v1395
  %v1397 = vpop.f32.mrb[0].mxu0
  %v1398 = vadd.f32 0.0, %v1397
  %v1399 = vpop.f32.mrb[0].mxu0
  %v1400 = vadd.f32 0.0, %v1399
  %v1401 = vpop.f32.mrb[0].mxu0
  %v1402 = vadd.f32 0.0, %v1401
  %1403 = vdwg.mxu0
  %1404 = vmatprep.subr.bf16.mxu0 %v1204
  %1405 = vmatpush1.bf16.msra.mxu0 %v1203
  %1406 = vmatprep.subr.bf16.mxu0 %v1212
  %1407 = vmatpush1.bf16.msra.mxu0 %v1211
  %1408 = vmatprep.subr.bf16.mxu0 %v1220
  %1409 = vmatpush1.bf16.msra.mxu0 %v1219
  %1410 = vmatprep.subr.bf16.mxu0 %v1228
  %1411 = vmatpush1.bf16.msra.mxu0 %v1227
  %1412 = vmatprep.subr.bf16.mxu0 0
  %1413 = vmatpush1.bf16.msra.mxu0 0
  %1414 = vmatprep.subr.bf16.mxu0 0
  %1415 = vmatpush1.bf16.msra.mxu0 0
  %1416 = vmatprep.subr.bf16.mxu0 0
  %1417 = vmatpush1.bf16.msra.mxu0 0
  %1418 = vmatprep.subr.bf16.mxu0 0
  %1419 = vmatpush1.bf16.msra.mxu0 0
  %1420 = vmatprep.subr.bf16.mxu0 0
  %1421 = vmatpush1.bf16.msra.mxu0 0
  %1422 = vmatprep.subr.bf16.mxu0 0
  %1423 = vmatpush1.bf16.msra.mxu0 0
  %1424 = vmatprep.subr.bf16.mxu0 0
  %1425 = vmatpush1.bf16.msra.mxu0 0
  %1426 = vmatprep.subr.bf16.mxu0 0
  %1427 = vmatpush1.bf16.msra.mxu0 0
  %1428 = vmatprep.subr.bf16.mxu0 0
  %1429 = vmatpush1.bf16.msra.mxu0 0
  %1430 = vmatprep.subr.bf16.mxu0 0
  %1431 = vmatpush1.bf16.msra.mxu0 0
  %1432 = vmatprep.subr.bf16.mxu0 0
  %1433 = vmatpush1.bf16.msra.mxu0 0
  %1434 = vmatprep.subr.bf16.mxu0 0
  %1435 = vmatpush1.bf16.msra.mxu0 0
  %1436 = vmatprep.mubr.bf16.mxu0 0
  %1437 = vmatmul.mubr.bf16.gmra.mrb[0].mxu0 %v1240
  %v1438 = vpop.f32.mrb[0].mxu0
  %v1439 = vadd.f32 0.0, %v1438
  %v1440 = vpop.f32.mrb[0].mxu0
  %v1441 = vadd.f32 0.0, %v1440
  %v1442 = vpop.f32.mrb[0].mxu0
  %v1443 = vadd.f32 0.0, %v1442
  %v1444 = vpop.f32.mrb[0].mxu0
  %v1445 = vadd.f32 0.0, %v1444
  %1446 = vmatprep.mubr.bf16.mxu0 0
  %1447 = vmatmul.mubr.bf16.gmra.mrb[0].mxu0 %v1243
  %v1448 = vpop.f32.mrb[0].mxu0
  %v1449 = vadd.f32 0.0, %v1448
  %v1450 = vpop.f32.mrb[0].mxu0
  %v1451 = vadd.f32 0.0, %v1450
  %v1452 = vpop.f32.mrb[0].mxu0
  %v1453 = vadd.f32 0.0, %v1452
  %v1454 = vpop.f32.mrb[0].mxu0
  %v1455 = vadd.f32 0.0, %v1454
  %1456 = vdwg.mxu0
  %v1457 = vadd.f32 %v1280, %v1180
  %v1458 = vadd.f32 %v1284, %v1185
  %v1459 = vadd.f32 %v1290, %v1190
  %v1460 = vadd.f32 %v1294, %v1195
  %v1461 = vmax.f32 %v1457, 0.0
  %v1462 = vmax.f32 %v1458, 0.0
  %v1463 = vmax.f32 %v1459, 0.0
  %v1464 = vmax.f32 %v1460, 0.0
  %v1465 = vadd.f32 %v1282, %v1180
  %v1466 = vadd.f32 %v1286, %v1185
  %v1467 = vadd.f32 %v1292, %v1190
  %v1468 = vadd.f32 %v1296, %v1195
  %v1469 = vmax.f32 %v1465, 0.0
  %v1470 = vmax.f32 %v1466, 0.0
  %v1471 = vmax.f32 %v1467, 0.0
  %v1472 = vmax.f32 %v1468, 0.0
  %v1473 = vadd.f32 %v1461, %v1469
  %v1474 = vadd.f32 %v1462, %v1470
  %v1475 = vadd.f32 %v1463, %v1471
  %v1476 = vadd.f32 %v1464, %v1472
  %v1477 = vadd.f32 %v1333, %v1180
  %v1478 = vadd.f32 %v1337, %v1185
  %v1479 = vadd.f32 %v1343, %v1190
  %v1480 = vadd.f32 %v1347, %v1195
  %v1481 = vmax.f32 %v1477, 0.0
  %v1482 = vmax.f32 %v1478, 0.0
  %v1483 = vmax.f32 %v1479, 0.0
  %v1484 = vmax.f32 %v1480, 0.0
  %v1485 = vadd.f32 %v1473, %v1481
  %v1486 = vadd.f32 %v1474, %v1482
  %v1487 = vadd.f32 %v1475, %v1483
  %v1488 = vadd.f32 %v1476, %v1484
  %v1489 = vadd.f32 %v1335, %v1180
  %v1490 = vadd.f32 %v1339, %v1185
  %v1491 = vadd.f32 %v1345, %v1190
  %v1492 = vadd.f32 %v1349, %v1195
  %v1493 = vmax.f32 %v1489, 0.0
  %v1494 = vmax.f32 %v1490, 0.0
  %v1495 = vmax.f32 %v1491, 0.0
  %v1496 = vmax.f32 %v1492, 0.0
  %v1497 = vadd.f32 %v1485, %v1493
  %v1498 = vadd.f32 %v1486, %v1494
  %v1499 = vadd.f32 %v1487, %v1495
  %v1500 = vadd.f32 %v1488, %v1496
  %v1501 = vadd.f32 %v1386, %v1180
  %v1502 = vadd.f32 %v1390, %v1185
  %v1503 = vadd.f32 %v1396, %v1190
  %v1504 = vadd.f32 %v1400, %v1195
  %v1505 = vmax.f32 %v1501, 0.0
  %v1506 = vmax.f32 %v1502, 0.0
  %v1507 = vmax.f32 %v1503, 0.0
  %v1508 = vmax.f32 %v1504, 0.0
  %v1509 = vadd.f32 %v1497, %v1505
  %v1510 = vadd.f32 %v1498, %v1506
  %v1511 = vadd.f32 %v1499, %v1507
  %v1512 = vadd.f32 %v1500, %v1508
  %v1513 = vadd.f32 %v1388, %v1180
  %v1514 = vadd.f32 %v1392, %v1185
  %v1515 = vadd.f32 %v1398, %v1190
  %v1516 = vadd.f32 %v1402, %v1195
  %v1517 = vmax.f32 %v1513, 0.0
  %v1518 = vmax.f32 %v1514, 0.0
  %v1519 = vmax.f32 %v1515, 0.0
  %v1520 = vmax.f32 %v1516, 0.0
  %v1521 = vadd.f32 %v1509, %v1517
  %v1522 = vadd.f32 %v1510, %v1518
  %v1523 = vadd.f32 %v1511, %v1519
  %v1524 = vadd.f32 %v1512, %v1520
  %v1525 = vadd.f32 %v1439, %v1180
  %v1526 = vadd.f32 %v1443, %v1185
  %v1527 = vadd.f32 %v1449, %v1190
  %v1528 = vadd.f32 %v1453, %v1195
  %v1529 = vmax.f32 %v1525, 0.0
  %v1530 = vmax.f32 %v1526, 0.0
  %v1531 = vmax.f32 %v1527, 0.0
  %v1532 = vmax.f32 %v1528, 0.0
  %v1533 = vadd.f32 %v1521, %v1529
  %v1534 = vadd.f32 %v1522, %v1530
  %v1535 = vadd.f32 %v1523, %v1531
  %v1536 = vadd.f32 %v1524, %v1532
  %v1537 = vadd.f32 %v1441, %v1180
  %v1538 = vadd.f32 %v1445, %v1185
  %v1539 = vadd.f32 %v1451, %v1190
  %v1540 = vadd.f32 %v1455, %v1195
  %v1541 = vmax.f32 %v1537, 0.0
  %v1542 = vmax.f32 %v1538, 0.0
  %v1543 = vmax.f32 %v1539, 0.0
  %v1544 = vmax.f32 %v1540, 0.0
  %v1545 = vadd.f32 %v1533, %v1541
  %v1546 = vadd.f32 %v1534, %v1542
  %v1547 = vadd.f32 %v1535, %v1543
  %v1548 = vadd.f32 %v1536, %v1544
  %1549 = vst [vmem:[%s8] sm:$0xff] %v1545
  %1550 = vst [vmem:[%s8 + $0x8] sm:$0xff] %v1546
  %1551 = vst [vmem:[%s8 + $0x10] sm:$0xff] %v1547
  %1552 = vst [vmem:[%s8 + $0x18] sm:$0xff] %v1548
  // Predicated region
  $region34: #{lap_pe_node_encoder.1} parent=0 // pred_check
    _
  $region35: #{lap_pe_node_encoder.1} parent=0 // pred_check_branch
    %1554 = sbr.rel (0) target = $region37
  $region36: #{lap_pe_node_encoder.1} parent=0 // pred_region
    _
  $region37: #{lap_pe_node_encoder.1} parent=0 // pred_fallthru
    _
  // Predicated region
  $region38: #{lap_pe_node_encoder.1} parent=0 // pred_check
    _
  $region39: #{lap_pe_node_encoder.1} parent=0 // pred_check_branch
    %1556 = sbr.rel (0) target = $region41
  $region40: #{lap_pe_node_encoder.1} parent=0 // pred_region
    _
  $region41: #{lap_pe_node_encoder.1} parent=0 // pred_fallthru
    _

</llo_original>
